<compile_context>
chip_gen: v7x
topology: tpu7x:2x2x1
jax: 0.10.0
libtpu: 0.0.40
codegen_flags: <defaults>
</compile_context>

<pallas_src>
import math

import jax
import jax.numpy as jnp
from jax.experimental import pallas as pl
from jax.experimental.pallas import tpu as pltpu

_HIGHEST = jax.lax.Precision.HIGHEST


def token_embedding_kernel(x_ref, w_ref, o_ref):
    # x_ref: [Bt, L, C_in]   w_ref: [3, C_in, d_model]   o_ref: [Bt, L, d_model]
    w0 = w_ref[0]          # [C, D]  tap k=0 (reads x[t-1])
    w1 = w_ref[1]          # [C, D]  tap k=1 (reads x[t])
    w2 = w_ref[2]          # [C, D]  tap k=2 (reads x[t+1])

    x = x_ref[...]                                  # [Bt, L, C]
    bt, L, C = x.shape

    # Circular shifts along the per-batch time axis (sublane dim) on the narrow [*, L, C]
    # tile ("roll the input, not the output"): cheap XLU work, no large f32 temporaries.
    x_m1 = jnp.roll(x, 1, axis=1)                   # x[:, t-1, :]
    x_p1 = jnp.roll(x, -1, axis=1)                  # x[:, t+1, :]

    if L % 8 == 0:
        # Review #1: collapse (Bt, L) into one matmul M axis -> three big (Bt*L, C) @ (C, D)
        # MXU matmuls and a single full-block store.  The leading-dim merge is a no-op
        # relayout when L is a multiple of the 8-row sublane tile.
        m = bt * L
        acc = jnp.dot(x_m1.reshape(m, C), w0,
                      preferred_element_type=jnp.float32, precision=_HIGHEST)
        acc = acc + jnp.dot(x.reshape(m, C), w1,
                            preferred_element_type=jnp.float32, precision=_HIGHEST)
        acc = acc + jnp.dot(x_p1.reshape(m, C), w2,
                            preferred_element_type=jnp.float32, precision=_HIGHEST)
        o_ref[...] = acc.reshape(bt, L, acc.shape[-1]).astype(o_ref.dtype)
    else:
        # Fallback only for L not a multiple of 8 (the merge above would need a sublane repack).
        for b in range(bt):
            acc = jnp.dot(x_m1[b], w0, preferred_element_type=jnp.float32, precision=_HIGHEST)
            acc = acc + jnp.dot(x[b], w1, preferred_element_type=jnp.float32, precision=_HIGHEST)
            acc = acc + jnp.dot(x_p1[b], w2, preferred_element_type=jnp.float32, precision=_HIGHEST)
            o_ref[b] = acc.astype(o_ref.dtype)


def _chip_info():
    """Best-effort (num_tensorcores, is_v7x); defaults to a single-TC chip (v5e/v6e)."""
    kind = ""
    try:
        kind = jax.devices()[0].device_kind.lower()
    except Exception:
        pass
    is_v7x = "v7" in kind
    num_cores = 2 if is_v7x else 1
    try:
        info = pltpu.get_tpu_info()
        for attr in ("num_cores", "num_tensorcores", "num_tensor_cores",
                     "tensorcore_count", "core_count"):
            v = getattr(info, attr, None)
            if v is None:
                continue
            try:
                v = int(v)
            except Exception:
                continue
            if v >= 1:
                num_cores = max(num_cores, v)
                break
    except Exception:
        pass
    return num_cores, is_v7x


def _pick_batch_tile(B, L, C, D, itemsize, *, num_cores, budget_bytes, row_target):
    """How many batch elements to process per grid step (must divide B)."""
    per_b = 2 * L * (C + D) * itemsize              # double-buffered x + out blocks per batch elem
    cap = max(1, budget_bytes // max(per_b, 1))     # VMEM budget for the pipelined blocks
    target = max(1, -(-row_target // max(L, 1)))    # ceil(row_target / L) -> amortise step overhead
    want = max(1, min(B, cap, target))
    if num_cores >= 2 and B >= num_cores:
        # Review #2: only force multiple grid steps when there is more than one TensorCore
        # to feed (v7x); on single-TC chips the grid is a purely sequential loop.
        want = min(want, max(1, B // num_cores))
    divisors = [d for d in range(1, B + 1) if B % d == 0]
    le = [d for d in divisors if d <= want]
    bt = max(le) if le else 1
    if num_cores >= 2:
        # Review #5: prefer an even number of grid steps so every TensorCore gets equal work.
        even = [d for d in le if (B // d) % num_cores == 0]
        if even:
            bt = max(even)
    return bt


def token_embedding(x, weight_kcd):
    """x: [B, L, C_in]; weight_kcd: [3, C_in, d_model] -> [B, L, d_model] (same dtype as x).

    Works for f32 or bf16 activations; bf16 I/O halves HBM traffic of this bandwidth-bound op
    (recommended default on v5e), while the contraction accumulates in f32 either way.
    """
    B, L, C = x.shape
    K, Cw, D = weight_kcd.shape
    assert K == 3 and Cw == C

    num_cores, is_v7x = _chip_info()
    if is_v7x or num_cores >= 2:
        # Review #4: v7x HBM is ~3.2 TB/s -> bigger tiles / fewer steps; set the scoped-VMEM
        # limit explicitly and stay well under the 64 MiB physical VMEM.
        budget_bytes, row_target, vmem_limit = 22 << 20, 1024, 28 << 20
    else:
        budget_bytes, row_target, vmem_limit = 8 << 20, 512, None

    bt = _pick_batch_tile(B, L, C, D, jnp.dtype(x.dtype).itemsize,
                          num_cores=num_cores, budget_bytes=budget_bytes,
                          row_target=row_target)
    grid = (B // bt,)

    # TODO(synk): add an L-tiled grid axis with a +/-1-row circular halo for long sequences where even a single-batch (1,L,C)+(1,L,D) block pair no longer fits the VMEM budget (review #6).
    # TODO(synk): lane-dense (bt, L*D) output flattening for d_model % 128 != 0 (review #3) needs a sublane->lane in-register relayout; skipped here to keep Mosaic lowering robust.
    return pl.pallas_call(
        token_embedding_kernel,
        out_shape=jax.ShapeDtypeStruct((B, L, D), x.dtype),
        grid_spec=pltpu.PrefetchScalarGridSpec(
            num_scalar_prefetch=0,
            grid=grid,
            in_specs=[
                pl.BlockSpec((bt, L, C), lambda i: (i, 0, 0)),
                # Constant block index across the grid -> fetched once, stays VMEM-resident.
                pl.BlockSpec((K, C, D), lambda i: (0, 0, 0)),
            ],
            out_specs=pl.BlockSpec((bt, L, D), lambda i: (i, 0, 0)),
        ),
        compiler_params=pltpu.CompilerParams(
            dimension_semantics=("parallel",),
            vmem_limit_bytes=vmem_limit),
    )(x, weight_kcd)


def make_weight(key, input_channels, d_model, kernel_size=3):
    """Deterministic kaiming_normal_(mode='fan_in', nonlinearity='leaky_relu') init, matching
    the nn.Conv1d weight [d_model, C_in, K], transposed to the kernel layout [K, C_in, d_model]."""
    negative_slope = 0.01  # PyTorch default leaky_relu param
    gain = math.sqrt(2.0 / (1.0 + negative_slope ** 2))
    fan_in = input_channels * kernel_size
    std = gain / math.sqrt(fan_in)
    w_ock = std * jax.random.normal(
        key, (d_model, input_channels, kernel_size), dtype=jnp.float32)
    return jnp.transpose(w_ock, (2, 1, 0))          # [d_model, C_in, K] -> [K, C_in, d_model]


def reference(x, weight_kcd):
    """Plain-JAX reference of the circular Conv1d (f32 compute) for correctness checks."""
    B, L, C = x.shape
    x = x.astype(jnp.float32)
    x_pad = jnp.concatenate([x[:, -1:, :], x, x[:, :1, :]], axis=1)  # [B, L+2, C]
    out = jnp.zeros((B, L, weight_kcd.shape[-1]), dtype=jnp.float32)
    for k in range(3):
        out = out + jnp.einsum("blc,cd->bld", x_pad[:, k:k + L, :],
                               weight_kcd[k].astype(jnp.float32), precision=_HIGHEST)
    return out


if __name__ == "__main__":
    B, L, C_in, d_model = 2, 16, 4, 32

    key = jax.random.PRNGKey(0)
    kx, kw = jax.random.split(key)
    x = jax.random.normal(kx, (B, L, C_in), dtype=jnp.float32)
    w = make_weight(kw, C_in, d_model)

    # f32 path (strict check against the plain-JAX reference).
    ref = reference(x, w)
    out = jax.block_until_ready(token_embedding(x, w))
    assert out.shape == (B, L, d_model) and out.dtype == x.dtype
    assert jnp.allclose(out, ref, rtol=1e-5, atol=1e-5), "f32 mismatch vs reference"

    # bf16 activation path (halved HBM traffic; f32 accumulation inside), compared against a
    # reference fed the same bf16-quantised inputs.
    x_bf16 = x.astype(jnp.bfloat16)
    ref_bf16 = reference(x_bf16, w)
    out_bf16 = jax.block_until_ready(token_embedding(x_bf16, w))
    assert out_bf16.dtype == jnp.bfloat16 and out_bf16.shape == (B, L, d_model)
    assert jnp.allclose(out_bf16.astype(jnp.float32), ref_bf16, rtol=2e-2, atol=2e-2), \
        "bf16 mismatch vs reference"

    print("KERNEL_OK")
</pallas_src>

<mosaic_0001>
module attributes {stable_mosaic.version = 11 : i64} {
  func.func @token_embedding_kernel(%arg0: i32, %arg1: memref<2x16x4xf32, #tpu.memory_space<vmem>>, %arg2: memref<3x4x32xf32, #tpu.memory_space<vmem>>, %arg3: memref<2x16x32xf32, #tpu.memory_space<vmem>>) attributes {dimension_semantics = [#tpu.dimension_semantics<parallel>], iteration_bounds = array<i64: 1>, scalar_prefetch = 0 : i64, scratch_operands = 0 : i64, tpu.core_type = #tpu.core_type<tc>, window_params = [{transform_indices = @transform_0, window_bounds = array<i64: 2, 16, 4>}, {pipeline_mode = #tpu.pipeline_mode<synchronous>, transform_indices = @transform_1, window_bounds = array<i64: 3, 4, 32>}, {transform_indices = @transform_2, window_bounds = array<i64: 2, 16, 32>}]} {
    %c0 = arith.constant 0 : index
    %c0_0 = arith.constant 0 : index
    %c0_1 = arith.constant 0 : index
    %0 = vector.load %arg2[%c0, %c0_0, %c0_1] : memref<3x4x32xf32, #tpu.memory_space<vmem>>, vector<1x4x32xf32>
    %1 = vector.shape_cast %0 : vector<1x4x32xf32> to vector<4x32xf32>
    %c1 = arith.constant 1 : index
    %c0_2 = arith.constant 0 : index
    %c0_3 = arith.constant 0 : index
    %2 = vector.load %arg2[%c1, %c0_2, %c0_3] : memref<3x4x32xf32, #tpu.memory_space<vmem>>, vector<1x4x32xf32>
    %3 = vector.shape_cast %2 : vector<1x4x32xf32> to vector<4x32xf32>
    %c2 = arith.constant 2 : index
    %c0_4 = arith.constant 0 : index
    %c0_5 = arith.constant 0 : index
    %4 = vector.load %arg2[%c2, %c0_4, %c0_5] : memref<3x4x32xf32, #tpu.memory_space<vmem>>, vector<1x4x32xf32>
    %5 = vector.shape_cast %4 : vector<1x4x32xf32> to vector<4x32xf32>
    %c0_6 = arith.constant 0 : index
    %c0_7 = arith.constant 0 : index
    %c0_8 = arith.constant 0 : index
    %6 = vector.load %arg1[%c0_6, %c0_7, %c0_8] : memref<2x16x4xf32, #tpu.memory_space<vmem>>, vector<2x16x4xf32>
    %7 = vector.extract_strided_slice %6 {offsets = [0, 15, 0], sizes = [2, 1, 4], strides = [1, 1, 1]} : vector<2x16x4xf32> to vector<2x1x4xf32>
    %8 = vector.extract_strided_slice %6 {offsets = [0, 0, 0], sizes = [2, 15, 4], strides = [1, 1, 1]} : vector<2x16x4xf32> to vector<2x15x4xf32>
    %9 = tpu.concatenate %7, %8 in 1 : vector<2x1x4xf32>, vector<2x15x4xf32> -> vector<2x16x4xf32>
    %10 = vector.extract_strided_slice %6 {offsets = [0, 1, 0], sizes = [2, 15, 4], strides = [1, 1, 1]} : vector<2x16x4xf32> to vector<2x15x4xf32>
    %11 = vector.extract_strided_slice %6 {offsets = [0, 0, 0], sizes = [2, 1, 4], strides = [1, 1, 1]} : vector<2x16x4xf32> to vector<2x1x4xf32>
    %12 = tpu.concatenate %10, %11 in 1 : vector<2x15x4xf32>, vector<2x1x4xf32> -> vector<2x16x4xf32>
    %13 = vector.shape_cast %9 : vector<2x16x4xf32> to vector<32x4xf32>
    %cst = arith.constant dense<0.000000e+00> : vector<32x32xf32>
    %14 = tpu.matmul %13, %1, %cst {dimension_numbers = #tpu.dot_dimension_numbers<[1], [0], [0], [1], [0, 0, 1, 1], [], []>, precision = #tpu.contract_precision<fp32>} : vector<32x4xf32>, vector<4x32xf32>, vector<32x32xf32> -> vector<32x32xf32>
    %15 = vector.shape_cast %6 : vector<2x16x4xf32> to vector<32x4xf32>
    %cst_9 = arith.constant dense<0.000000e+00> : vector<32x32xf32>
    %16 = tpu.matmul %15, %3, %cst_9 {dimension_numbers = #tpu.dot_dimension_numbers<[1], [0], [0], [1], [0, 0, 1, 1], [], []>, precision = #tpu.contract_precision<fp32>} : vector<32x4xf32>, vector<4x32xf32>, vector<32x32xf32> -> vector<32x32xf32>
    %17 = arith.addf %14, %16 : vector<32x32xf32>
    %18 = vector.shape_cast %12 : vector<2x16x4xf32> to vector<32x4xf32>
    %cst_10 = arith.constant dense<0.000000e+00> : vector<32x32xf32>
    %19 = tpu.matmul %18, %5, %cst_10 {dimension_numbers = #tpu.dot_dimension_numbers<[1], [0], [0], [1], [0, 0, 1, 1], [], []>, precision = #tpu.contract_precision<fp32>} : vector<32x4xf32>, vector<4x32xf32>, vector<32x32xf32> -> vector<32x32xf32>
    %20 = arith.addf %17, %19 : vector<32x32xf32>
    %21 = vector.shape_cast %20 : vector<32x32xf32> to vector<2x16x32xf32>
    %c0_11 = arith.constant 0 : index
    %c0_12 = arith.constant 0 : index
    %c0_13 = arith.constant 0 : index
    %22 = vector.load %arg3[%c0_11, %c0_12, %c0_13] : memref<2x16x32xf32, #tpu.memory_space<vmem>>, vector<2x16x32xf32>
    tpu.vector_store %arg3[%c0_11, %c0_12, %c0_13], %21 {strides = array<i32>} : memref<2x16x32xf32, #tpu.memory_space<vmem>>, vector<2x16x32xf32>,
    return
  }
  func.func @transform_0(%arg0: i32) -> (i32, i32, i32) {
    %c0_i32 = arith.constant 0 : i32
    %c0_i32_0 = arith.constant 0 : i32
    %c0_i32_1 = arith.constant 0 : i32
    return %arg0, %c0_i32, %c0_i32_0 : i32, i32, i32
  }
  func.func @transform_1(%arg0: i32) -> (i32, i32, i32) {
    %c0_i32 = arith.constant 0 : i32
    %c0_i32_0 = arith.constant 0 : i32
    %c0_i32_1 = arith.constant 0 : i32
    %c0_i32_2 = arith.constant 0 : i32
    return %c0_i32, %c0_i32_0, %c0_i32_1 : i32, i32, i32
  }
  func.func @transform_2(%arg0: i32) -> (i32, i32, i32) {
    %c0_i32 = arith.constant 0 : i32
    %c0_i32_0 = arith.constant 0 : i32
    %c0_i32_1 = arith.constant 0 : i32
    return %arg0, %c0_i32, %c0_i32_0 : i32, i32, i32
  }
}

</mosaic_0001>

<llo_original>
// kernel: tpu_custom_call.1
$region0: #{tpu_custom_call.1}
  #allocation0 [shape = 'u32[]', space=smem, size = 0x4, offset = 0x4, fixed_abs, tag = 'smem constant byte address 0x4 - core index']
  #allocation1 [shape = 'u32[144,128]{1,0:T(1,128)}', space=vmem, size = 0x12000, scoped, tag = 'internal scratch']
  %s0 = inlined_call_operand.vmem [shape: f32[2,16,4], index: 0, kind: input, shape index: {}]
  %s1 = inlined_call_operand.vmem [shape: f32[3,4,32], index: 1, kind: input, shape index: {}]
  %s2 = inlined_call_operand.hbm [shape: f32[2,16,32], index: 2, kind: output, shape index: {}]
  %s3 = sld [smem:[#allocation0]]
  $region18: #{tpu_custom_call.1} parent=0
    _
  %s5 = ssub.s32 1, %s3
  %s6 = scalar_select 0, %s5, %s3
  $region1: #{tpu_custom_call.1} parent=0
    #allocation2 [shape = 'u8[16384]{0}', space=vmem, size = 0x4000, scoped, tag = 'output window, operand 0, single buffered']
    #allocation3 [shape = 's32[1]{0}', space=sflag, size = 0x4, scoped, tag = 'scoped memory for tpu_custom_call.1']
    %7 = vsyncpa [#allocation3], 0
    // Predicated region
    $region2: #{tpu_custom_call.1} parent=1 // pred_check
      _
    $region3: #{tpu_custom_call.1} parent=1 // pred_check_branch
      %9 = sbr.rel (0) target = $region5
    $region4: #{tpu_custom_call.1} parent=1 // pred_region
      _
    $region5: #{tpu_custom_call.1} parent=1 // pred_fallthru
      _
    // Predicated region
    $region6: #{tpu_custom_call.1} parent=1 // pred_check
      _
    $region7: #{tpu_custom_call.1} parent=1 // pred_check_branch
      %11 = sbr.rel (0) target = $region9
    $region8: #{tpu_custom_call.1} parent=1 // pred_region
      _
    $region9: #{tpu_custom_call.1} parent=1 // pred_fallthru
      _
    %v12 = vld [vmem:[%s1] sm:$0xf]
    %s13 = scalar_lea.vmem %s1, 4
    %v14 = vld [vmem:[%s13] sm:$0xf]
    %s15 = scalar_lea.vmem %s1, 8
    %v16 = vld [vmem:[%s15] sm:$0xf]
    %v17 = vld [vmem:[%s0] sm:$0xff]
    %v18 = vld [vmem:[%s0 + $0x8] sm:$0xff]
    %v19 = vld [vmem:[%s0 + $0x10] sm:$0xff]
    %v20 = vld [vmem:[%s0 + $0x18] sm:$0xff]
    %v23 = vrot.slane %v18, 7
    %v24 = vrot.slane %v20, 7
    %vm29 = vcmask 1040384
    %v30 = vrot.slane %v17, 7
    %v31 = vsel %vm29, %v30, %v23
    %v32 = vrot.slane %v19, 7
    %v33 = vsel %vm29, %v32, %v24
    %v36 = vsel %vm29, %v23, %v30
    %v37 = vsel %vm29, %v24, %v32
    %vm38 = vcmask 1046528
    %v39 = vrot.slane %v17, 1
    %v40 = vrot.slane %v18, 1
    %v41 = vsel %vm38, %v39, %v40
    %v42 = vrot.slane %v19, 1
    %v43 = vrot.slane %v20, 1
    %v44 = vsel %vm38, %v42, %v43
    %v49 = vsel %vm38, %v40, %v39
    %v50 = vsel %vm38, %v43, %v42
    %vm51 = vcmask 31744
    %v52 = vsel %vm51, %v17, 0
    %v54 = vsel %vm51, %v18, 0
    %v56 = vsel %vm51, %v19, 0
    %v58 = vsel %vm51, %v20, 0
    %vm60 = vcmask 1043456
    %v62 = vsel %vm60, %v14, 0
    %64 = vmatprep.subr.mxu0 0.0
    %v65 = vand.u32 %v62, 4294901760
    %66 = vmatpush1.msra.mxu0 %v65
    %67 = vmatprep.subr.mxu0 0.0
    %68 = vmatpush1.msra.mxu0 0.0
    %69 = vmatprep.subr.mxu0 0.0
    %70 = vmatpush1.msra.mxu0 0.0
    %71 = vmatprep.subr.mxu0 0.0
    %72 = vmatpush1.msra.mxu0 0.0
    %73 = vmatprep.subr.mxu0 0.0
    %74 = vmatpush1.msra.mxu0 0.0
    %75 = vmatprep.subr.mxu0 0.0
    %76 = vmatpush1.msra.mxu0 0.0
    %77 = vmatprep.subr.mxu0 0.0
    %78 = vmatpush1.msra.mxu0 0.0
    %79 = vmatprep.subr.mxu0 0.0
    %80 = vmatpush1.msra.mxu0 0.0
    %81 = vmatprep.subr.mxu0 0.0
    %82 = vmatpush1.msra.mxu0 0.0
    %83 = vmatprep.subr.mxu0 0.0
    %84 = vmatpush1.msra.mxu0 0.0
    %85 = vmatprep.subr.mxu0 0.0
    %86 = vmatpush1.msra.mxu0 0.0
    %87 = vmatprep.subr.mxu0 0.0
    %88 = vmatpush1.msra.mxu0 0.0
    %89 = vmatprep.subr.mxu0 0.0
    %90 = vmatpush1.msra.mxu0 0.0
    %91 = vmatprep.subr.mxu0 0.0
    %92 = vmatpush1.msra.mxu0 0.0
    %93 = vmatprep.subr.mxu0 0.0
    %94 = vmatpush1.msra.mxu0 0.0
    %95 = vmatprep.subr.mxu0 0.0
    %96 = vmatpush1.msra.mxu0 0.0
    %97 = vmatprep.subr.mxu0 0.0
    %98 = vmatpush1.msra.mxu0 0.0
    %99 = vmatprep.subr.mxu0 0.0
    %100 = vmatpush1.msra.mxu0 0.0
    %101 = vmatprep.subr.mxu0 0.0
    %102 = vmatpush1.msra.mxu0 0.0
    %103 = vmatprep.subr.mxu0 0.0
    %104 = vmatpush1.msra.mxu0 0.0
    %105 = vmatprep.subr.mxu0 0.0
    %106 = vmatpush1.msra.mxu0 0.0
    %107 = vmatprep.subr.mxu0 0.0
    %108 = vmatpush1.msra.mxu0 0.0
    %109 = vmatprep.subr.mxu0 0.0
    %110 = vmatpush1.msra.mxu0 0.0
    %111 = vmatprep.subr.mxu0 0.0
    %112 = vmatpush1.msra.mxu0 0.0
    %113 = vmatprep.subr.mxu0 0.0
    %114 = vmatpush1.msra.mxu0 0.0
    %115 = vmatprep.subr.mxu0 0.0
    %116 = vmatpush1.msra.mxu0 0.0
    %117 = vmatprep.subr.mxu0 0.0
    %118 = vmatpush1.msra.mxu0 0.0
    %119 = vmatprep.subr.mxu0 0.0
    %120 = vmatpush1.msra.mxu0 0.0
    %121 = vmatprep.subr.mxu0 0.0
    %122 = vmatpush1.msra.mxu0 0.0
    %123 = vmatprep.subr.mxu0 0.0
    %124 = vmatpush1.msra.mxu0 0.0
    %125 = vmatprep.subr.mxu0 0.0
    %126 = vmatpush1.msra.mxu0 0.0
    %127 = vmatprep.subr.mxu0 0.0
    %128 = vmatpush1.msra.mxu0 0.0
    %129 = vmatprep.mubr.f32.mxu0 0.0
    %v130 = vand.u32 %v52, 4294901760
    %v131 = vsub.f32 %v52, %v130
    %v132 = vand.u32 %v131, 4294901760
    %v133 = vsub.f32 %v131, %v132
    %v134 = vand.u32 %v133, 4294901760
    %135 = vmatmul.mubr.f32.gmra.mrb[0].mxu0 %v134
    %v136 = vpop.f32.mrb[0].mxu0
    %v137 = vadd.f32 0.0, %v136
    %v138 = vpop.f32.mrb[0].mxu0
    %139 = vmatprep.mubr.f32.mxu0 0.0
    %v140 = vand.u32 %v54, 4294901760
    %v141 = vsub.f32 %v54, %v140
    %v142 = vand.u32 %v141, 4294901760
    %v143 = vsub.f32 %v141, %v142
    %v144 = vand.u32 %v143, 4294901760
    %145 = vmatmul.mubr.f32.gmra.mrb[0].mxu0 %v144
    %v146 = vpop.f32.mrb[0].mxu0
    %v147 = vadd.f32 0.0, %v146
    %v148 = vpop.f32.mrb[0].mxu0
    %149 = vmatprep.mubr.f32.mxu0 0.0
    %v150 = vand.u32 %v56, 4294901760
    %v151 = vsub.f32 %v56, %v150
    %v152 = vand.u32 %v151, 4294901760
    %v153 = vsub.f32 %v151, %v152
    %v154 = vand.u32 %v153, 4294901760
    %155 = vmatmul.mubr.f32.gmra.mrb[0].mxu0 %v154
    %v156 = vpop.f32.mrb[0].mxu0
    %v157 = vadd.f32 0.0, %v156
    %v158 = vpop.f32.mrb[0].mxu0
    %159 = vmatprep.mubr.f32.mxu0 0.0
    %v160 = vand.u32 %v58, 4294901760
    %v161 = vsub.f32 %v58, %v160
    %v162 = vand.u32 %v161, 4294901760
    %v163 = vsub.f32 %v161, %v162
    %v164 = vand.u32 %v163, 4294901760
    %165 = vmatmul.mubr.f32.gmra.mrb[0].mxu0 %v164
    %v166 = vpop.f32.mrb[0].mxu0
    %v167 = vadd.f32 0.0, %v166
    %v168 = vpop.f32.mrb[0].mxu0
    %169 = vdwg.mxu0
    %170 = vmatprep.subr.mxu0 0.0
    %v171 = vand.u32 %v62, 4294901760
    %v172 = vsub.f32 %v62, %v171
    %v173 = vand.u32 %v172, 4294901760
    %v174 = vsub.f32 %v172, %v173
    %v175 = vand.u32 %v174, 4294901760
    %176 = vmatpush1.msra.mxu0 %v175
    %177 = vmatprep.subr.mxu0 0.0
    %178 = vmatpush1.msra.mxu0 0.0
    %179 = vmatprep.subr.mxu0 0.0
    %180 = vmatpush1.msra.mxu0 0.0
    %181 = vmatprep.subr.mxu0 0.0
    %182 = vmatpush1.msra.mxu0 0.0
    %183 = vmatprep.subr.mxu0 0.0
    %184 = vmatpush1.msra.mxu0 0.0
    %185 = vmatprep.subr.mxu0 0.0
    %186 = vmatpush1.msra.mxu0 0.0
    %187 = vmatprep.subr.mxu0 0.0
    %188 = vmatpush1.msra.mxu0 0.0
    %189 = vmatprep.subr.mxu0 0.0
    %190 = vmatpush1.msra.mxu0 0.0
    %191 = vmatprep.subr.mxu0 0.0
    %192 = vmatpush1.msra.mxu0 0.0
    %193 = vmatprep.subr.mxu0 0.0
    %194 = vmatpush1.msra.mxu0 0.0
    %195 = vmatprep.subr.mxu0 0.0
    %196 = vmatpush1.msra.mxu0 0.0
    %197 = vmatprep.subr.mxu0 0.0
    %198 = vmatpush1.msra.mxu0 0.0
    %199 = vmatprep.subr.mxu0 0.0
    %200 = vmatpush1.msra.mxu0 0.0
    %201 = vmatprep.subr.mxu0 0.0
    %202 = vmatpush1.msra.mxu0 0.0
    %203 = vmatprep.subr.mxu0 0.0
    %204 = vmatpush1.msra.mxu0 0.0
    %205 = vmatprep.subr.mxu0 0.0
    %206 = vmatpush1.msra.mxu0 0.0
    %207 = vmatprep.subr.mxu0 0.0
    %208 = vmatpush1.msra.mxu0 0.0
    %209 = vmatprep.subr.mxu0 0.0
    %210 = vmatpush1.msra.mxu0 0.0
    %211 = vmatprep.subr.mxu0 0.0
    %212 = vmatpush1.msra.mxu0 0.0
    %213 = vmatprep.subr.mxu0 0.0
    %214 = vmatpush1.msra.mxu0 0.0
    %215 = vmatprep.subr.mxu0 0.0
    %216 = vmatpush1.msra.mxu0 0.0
    %217 = vmatprep.subr.mxu0 0.0
    %218 = vmatpush1.msra.mxu0 0.0
    %219 = vmatprep.subr.mxu0 0.0
    %220 = vmatpush1.msra.mxu0 0.0
    %221 = vmatprep.subr.mxu0 0.0
    %222 = vmatpush1.msra.mxu0 0.0
    %223 = vmatprep.subr.mxu0 0.0
    %224 = vmatpush1.msra.mxu0 0.0
    %225 = vmatprep.subr.mxu0 0.0
    %226 = vmatpush1.msra.mxu0 0.0
    %227 = vmatprep.subr.mxu0 0.0
    %228 = vmatpush1.msra.mxu0 0.0
    %229 = vmatprep.subr.mxu0 0.0
    %230 = vmatpush1.msra.mxu0 0.0
    %231 = vmatprep.subr.mxu0 0.0
    %232 = vmatpush1.msra.mxu0 0.0
    %233 = vmatprep.subr.mxu0 0.0
    %234 = vmatpush1.msra.mxu0 0.0
    %235 = vmatprep.subr.mxu0 0.0
    %236 = vmatpush1.msra.mxu0 0.0
    %237 = vmatprep.subr.mxu0 0.0
    %238 = vmatpush1.msra.mxu0 0.0
    %239 = vmatprep.mubr.f32.mxu0 0.0
    %v240 = vand.u32 %v52, 4294901760
    %241 = vmatmul.mubr.f32.gmra.mrb[0].mxu0 %v240
    %v242 = vpop.f32.mrb[0].mxu0
    %v243 = vadd.f32 %v137, %v242
    %v244 = vpop.f32.mrb[0].mxu0
    %245 = vmatprep.mubr.f32.mxu0 0.0
    %v246 = vand.u32 %v54, 4294901760
    %247 = vmatmul.mubr.f32.gmra.mrb[0].mxu0 %v246
    %v248 = vpop.f32.mrb[0].mxu0
    %v249 = vadd.f32 %v147, %v248
    %v250 = vpop.f32.mrb[0].mxu0
    %251 = vmatprep.mubr.f32.mxu0 0.0
    %v252 = vand.u32 %v56, 4294901760
    %253 = vmatmul.mubr.f32.gmra.mrb[0].mxu0 %v252
    %v254 = vpop.f32.mrb[0].mxu0
    %v255 = vadd.f32 %v157, %v254
    %v256 = vpop.f32.mrb[0].mxu0
    %257 = vmatprep.mubr.f32.mxu0 0.0
    %v258 = vand.u32 %v58, 4294901760
    %259 = vmatmul.mubr.f32.gmra.mrb[0].mxu0 %v258
    %v260 = vpop.f32.mrb[0].mxu0
    %v261 = vadd.f32 %v167, %v260
    %v262 = vpop.f32.mrb[0].mxu0
    %263 = vdwg.mxu0
    %264 = vmatprep.subr.mxu0 0.0
    %v265 = vand.u32 %v62, 4294901760
    %v266 = vsub.f32 %v62, %v265
    %267 = vmatpush1.msra.mxu0 %v266
    %268 = vmatprep.subr.mxu0 0.0
    %269 = vmatpush1.msra.mxu0 0.0
    %270 = vmatprep.subr.mxu0 0.0
    %271 = vmatpush1.msra.mxu0 0.0
    %272 = vmatprep.subr.mxu0 0.0
    %273 = vmatpush1.msra.mxu0 0.0
    %274 = vmatprep.subr.mxu0 0.0
    %275 = vmatpush1.msra.mxu0 0.0
    %276 = vmatprep.subr.mxu0 0.0
    %277 = vmatpush1.msra.mxu0 0.0
    %278 = vmatprep.subr.mxu0 0.0
    %279 = vmatpush1.msra.mxu0 0.0
    %280 = vmatprep.subr.mxu0 0.0
    %281 = vmatpush1.msra.mxu0 0.0
    %282 = vmatprep.subr.mxu0 0.0
    %283 = vmatpush1.msra.mxu0 0.0
    %284 = vmatprep.subr.mxu0 0.0
    %285 = vmatpush1.msra.mxu0 0.0
    %286 = vmatprep.subr.mxu0 0.0
    %287 = vmatpush1.msra.mxu0 0.0
    %288 = vmatprep.subr.mxu0 0.0
    %289 = vmatpush1.msra.mxu0 0.0
    %290 = vmatprep.subr.mxu0 0.0
    %291 = vmatpush1.msra.mxu0 0.0
    %292 = vmatprep.subr.mxu0 0.0
    %293 = vmatpush1.msra.mxu0 0.0
    %294 = vmatprep.subr.mxu0 0.0
    %295 = vmatpush1.msra.mxu0 0.0
    %296 = vmatprep.subr.mxu0 0.0
    %297 = vmatpush1.msra.mxu0 0.0
    %298 = vmatprep.subr.mxu0 0.0
    %299 = vmatpush1.msra.mxu0 0.0
    %300 = vmatprep.subr.mxu0 0.0
    %301 = vmatpush1.msra.mxu0 0.0
    %302 = vmatprep.subr.mxu0 0.0
    %303 = vmatpush1.msra.mxu0 0.0
    %304 = vmatprep.subr.mxu0 0.0
    %305 = vmatpush1.msra.mxu0 0.0
    %306 = vmatprep.subr.mxu0 0.0
    %307 = vmatpush1.msra.mxu0 0.0
    %308 = vmatprep.subr.mxu0 0.0
    %309 = vmatpush1.msra.mxu0 0.0
    %310 = vmatprep.subr.mxu0 0.0
    %311 = vmatpush1.msra.mxu0 0.0
    %312 = vmatprep.subr.mxu0 0.0
    %313 = vmatpush1.msra.mxu0 0.0
    %314 = vmatprep.subr.mxu0 0.0
    %315 = vmatpush1.msra.mxu0 0.0
    %316 = vmatprep.subr.mxu0 0.0
    %317 = vmatpush1.msra.mxu0 0.0
    %318 = vmatprep.subr.mxu0 0.0
    %319 = vmatpush1.msra.mxu0 0.0
    %320 = vmatprep.subr.mxu0 0.0
    %321 = vmatpush1.msra.mxu0 0.0
    %322 = vmatprep.subr.mxu0 0.0
    %323 = vmatpush1.msra.mxu0 0.0
    %324 = vmatprep.subr.mxu0 0.0
    %325 = vmatpush1.msra.mxu0 0.0
    %326 = vmatprep.subr.mxu0 0.0
    %327 = vmatpush1.msra.mxu0 0.0
    %328 = vmatprep.subr.mxu0 0.0
    %329 = vmatpush1.msra.mxu0 0.0
    %330 = vmatprep.mubr.f32.mxu0 0.0
    %v331 = vand.u32 %v52, 4294901760
    %v332 = vsub.f32 %v52, %v331
    %333 = vmatmul.mubr.f32.gmra.mrb[0].mxu0 %v332
    %v334 = vpop.f32.mrb[0].mxu0
    %v335 = vadd.f32 %v243, %v334
    %v336 = vpop.f32.mrb[0].mxu0
    %337 = vmatprep.mubr.f32.mxu0 0.0
    %v338 = vand.u32 %v54, 4294901760
    %v339 = vsub.f32 %v54, %v338
    %340 = vmatmul.mubr.f32.gmra.mrb[0].mxu0 %v339
    %v341 = vpop.f32.mrb[0].mxu0
    %v342 = vadd.f32 %v249, %v341
    %v343 = vpop.f32.mrb[0].mxu0
    %344 = vmatprep.mubr.f32.mxu0 0.0
    %v345 = vand.u32 %v56, 4294901760
    %v346 = vsub.f32 %v56, %v345
    %347 = vmatmul.mubr.f32.gmra.mrb[0].mxu0 %v346
    %v348 = vpop.f32.mrb[0].mxu0
    %v349 = vadd.f32 %v255, %v348
    %v350 = vpop.f32.mrb[0].mxu0
    %351 = vmatprep.mubr.f32.mxu0 0.0
    %v352 = vand.u32 %v58, 4294901760
    %v353 = vsub.f32 %v58, %v352
    %354 = vmatmul.mubr.f32.gmra.mrb[0].mxu0 %v353
    %v355 = vpop.f32.mrb[0].mxu0
    %v356 = vadd.f32 %v261, %v355
    %v357 = vpop.f32.mrb[0].mxu0
    %358 = vdwg.mxu0
    %359 = vmatprep.subr.mxu0 0.0
    %v360 = vand.u32 %v62, 4294901760
    %361 = vmatpush1.msra.mxu0 %v360
    %362 = vmatprep.subr.mxu0 0.0
    %363 = vmatpush1.msra.mxu0 0.0
    %364 = vmatprep.subr.mxu0 0.0
    %365 = vmatpush1.msra.mxu0 0.0
    %366 = vmatprep.subr.mxu0 0.0
    %367 = vmatpush1.msra.mxu0 0.0
    %368 = vmatprep.subr.mxu0 0.0
    %369 = vmatpush1.msra.mxu0 0.0
    %370 = vmatprep.subr.mxu0 0.0
    %371 = vmatpush1.msra.mxu0 0.0
    %372 = vmatprep.subr.mxu0 0.0
    %373 = vmatpush1.msra.mxu0 0.0
    %374 = vmatprep.subr.mxu0 0.0
    %375 = vmatpush1.msra.mxu0 0.0
    %376 = vmatprep.subr.mxu0 0.0
    %377 = vmatpush1.msra.mxu0 0.0
    %378 = vmatprep.subr.mxu0 0.0
    %379 = vmatpush1.msra.mxu0 0.0
    %380 = vmatprep.subr.mxu0 0.0
    %381 = vmatpush1.msra.mxu0 0.0
    %382 = vmatprep.subr.mxu0 0.0
    %383 = vmatpush1.msra.mxu0 0.0
    %384 = vmatprep.subr.mxu0 0.0
    %385 = vmatpush1.msra.mxu0 0.0
    %386 = vmatprep.subr.mxu0 0.0
    %387 = vmatpush1.msra.mxu0 0.0
    %388 = vmatprep.subr.mxu0 0.0
    %389 = vmatpush1.msra.mxu0 0.0
    %390 = vmatprep.subr.mxu0 0.0
    %391 = vmatpush1.msra.mxu0 0.0
    %392 = vmatprep.subr.mxu0 0.0
    %393 = vmatpush1.msra.mxu0 0.0
    %394 = vmatprep.subr.mxu0 0.0
    %395 = vmatpush1.msra.mxu0 0.0
    %396 = vmatprep.subr.mxu0 0.0
    %397 = vmatpush1.msra.mxu0 0.0
    %398 = vmatprep.subr.mxu0 0.0
    %399 = vmatpush1.msra.mxu0 0.0
    %400 = vmatprep.subr.mxu0 0.0
    %401 = vmatpush1.msra.mxu0 0.0
    %402 = vmatprep.subr.mxu0 0.0
    %403 = vmatpush1.msra.mxu0 0.0
    %404 = vmatprep.subr.mxu0 0.0
    %405 = vmatpush1.msra.mxu0 0.0
    %406 = vmatprep.subr.mxu0 0.0
    %407 = vmatpush1.msra.mxu0 0.0
    %408 = vmatprep.subr.mxu0 0.0
    %409 = vmatpush1.msra.mxu0 0.0
    %410 = vmatprep.subr.mxu0 0.0
    %411 = vmatpush1.msra.mxu0 0.0
    %412 = vmatprep.subr.mxu0 0.0
    %413 = vmatpush1.msra.mxu0 0.0
    %414 = vmatprep.subr.mxu0 0.0
    %415 = vmatpush1.msra.mxu0 0.0
    %416 = vmatprep.subr.mxu0 0.0
    %417 = vmatpush1.msra.mxu0 0.0
    %418 = vmatprep.subr.mxu0 0.0
    %419 = vmatpush1.msra.mxu0 0.0
    %420 = vmatprep.subr.mxu0 0.0
    %421 = vmatpush1.msra.mxu0 0.0
    %422 = vmatprep.subr.mxu0 0.0
    %423 = vmatpush1.msra.mxu0 0.0
    %424 = vmatprep.mubr.f32.mxu0 0.0
    %v425 = vand.u32 %v52, 4294901760
    %v426 = vsub.f32 %v52, %v425
    %v427 = vand.u32 %v426, 4294901760
    %428 = vmatmul.mubr.f32.gmra.mrb[0].mxu0 %v427
    %v429 = vpop.f32.mrb[0].mxu0
    %v430 = vadd.f32 %v335, %v429
    %v431 = vpop.f32.mrb[0].mxu0
    %432 = vmatprep.mubr.f32.mxu0 0.0
    %v433 = vand.u32 %v54, 4294901760
    %v434 = vsub.f32 %v54, %v433
    %v435 = vand.u32 %v434, 4294901760
    %436 = vmatmul.mubr.f32.gmra.mrb[0].mxu0 %v435
    %v437 = vpop.f32.mrb[0].mxu0
    %v438 = vadd.f32 %v342, %v437
    %v439 = vpop.f32.mrb[0].mxu0
    %440 = vmatprep.mubr.f32.mxu0 0.0
    %v441 = vand.u32 %v56, 4294901760
    %v442 = vsub.f32 %v56, %v441
    %v443 = vand.u32 %v442, 4294901760
    %444 = vmatmul.mubr.f32.gmra.mrb[0].mxu0 %v443
    %v445 = vpop.f32.mrb[0].mxu0
    %v446 = vadd.f32 %v349, %v445
    %v447 = vpop.f32.mrb[0].mxu0
    %448 = vmatprep.mubr.f32.mxu0 0.0
    %v449 = vand.u32 %v58, 4294901760
    %v450 = vsub.f32 %v58, %v449
    %v451 = vand.u32 %v450, 4294901760
    %452 = vmatmul.mubr.f32.gmra.mrb[0].mxu0 %v451
    %v453 = vpop.f32.mrb[0].mxu0
    %v454 = vadd.f32 %v356, %v453
    %v455 = vpop.f32.mrb[0].mxu0
    %456 = vdwg.mxu0
    %457 = vmatprep.subr.mxu0 0.0
    %v458 = vand.u32 %v62, 4294901760
    %v459 = vsub.f32 %v62, %v458
    %v460 = vand.u32 %v459, 4294901760
    %461 = vmatpush1.msra.mxu0 %v460
    %462 = vmatprep.subr.mxu0 0.0
    %463 = vmatpush1.msra.mxu0 0.0
    %464 = vmatprep.subr.mxu0 0.0
    %465 = vmatpush1.msra.mxu0 0.0
    %466 = vmatprep.subr.mxu0 0.0
    %467 = vmatpush1.msra.mxu0 0.0
    %468 = vmatprep.subr.mxu0 0.0
    %469 = vmatpush1.msra.mxu0 0.0
    %470 = vmatprep.subr.mxu0 0.0
    %471 = vmatpush1.msra.mxu0 0.0
    %472 = vmatprep.subr.mxu0 0.0
    %473 = vmatpush1.msra.mxu0 0.0
    %474 = vmatprep.subr.mxu0 0.0
    %475 = vmatpush1.msra.mxu0 0.0
    %476 = vmatprep.subr.mxu0 0.0
    %477 = vmatpush1.msra.mxu0 0.0
    %478 = vmatprep.subr.mxu0 0.0
    %479 = vmatpush1.msra.mxu0 0.0
    %480 = vmatprep.subr.mxu0 0.0
    %481 = vmatpush1.msra.mxu0 0.0
    %482 = vmatprep.subr.mxu0 0.0
    %483 = vmatpush1.msra.mxu0 0.0
    %484 = vmatprep.subr.mxu0 0.0
    %485 = vmatpush1.msra.mxu0 0.0
    %486 = vmatprep.subr.mxu0 0.0
    %487 = vmatpush1.msra.mxu0 0.0
    %488 = vmatprep.subr.mxu0 0.0
    %489 = vmatpush1.msra.mxu0 0.0
    %490 = vmatprep.subr.mxu0 0.0
    %491 = vmatpush1.msra.mxu0 0.0
    %492 = vmatprep.subr.mxu0 0.0
    %493 = vmatpush1.msra.mxu0 0.0
    %494 = vmatprep.subr.mxu0 0.0
    %495 = vmatpush1.msra.mxu0 0.0
    %496 = vmatprep.subr.mxu0 0.0
    %497 = vmatpush1.msra.mxu0 0.0
    %498 = vmatprep.subr.mxu0 0.0
    %499 = vmatpush1.msra.mxu0 0.0
    %500 = vmatprep.subr.mxu0 0.0
    %501 = vmatpush1.msra.mxu0 0.0
    %502 = vmatprep.subr.mxu0 0.0
    %503 = vmatpush1.msra.mxu0 0.0
    %504 = vmatprep.subr.mxu0 0.0
    %505 = vmatpush1.msra.mxu0 0.0
    %506 = vmatprep.subr.mxu0 0.0
    %507 = vmatpush1.msra.mxu0 0.0
    %508 = vmatprep.subr.mxu0 0.0
    %509 = vmatpush1.msra.mxu0 0.0
    %510 = vmatprep.subr.mxu0 0.0
    %511 = vmatpush1.msra.mxu0 0.0
    %512 = vmatprep.subr.mxu0 0.0
    %513 = vmatpush1.msra.mxu0 0.0
    %514 = vmatprep.subr.mxu0 0.0
    %515 = vmatpush1.msra.mxu0 0.0
    %516 = vmatprep.subr.mxu0 0.0
    %517 = vmatpush1.msra.mxu0 0.0
    %518 = vmatprep.subr.mxu0 0.0
    %519 = vmatpush1.msra.mxu0 0.0
    %520 = vmatprep.subr.mxu0 0.0
    %521 = vmatpush1.msra.mxu0 0.0
    %522 = vmatprep.subr.mxu0 0.0
    %523 = vmatpush1.msra.mxu0 0.0
    %524 = vmatprep.mubr.f32.mxu0 0.0
    %v525 = vand.u32 %v52, 4294901760
    %526 = vmatmul.mubr.f32.gmra.mrb[0].mxu0 %v525
    %v527 = vpop.f32.mrb[0].mxu0
    %v528 = vadd.f32 %v430, %v527
    %v529 = vpop.f32.mrb[0].mxu0
    %530 = vmatprep.mubr.f32.mxu0 0.0
    %v531 = vand.u32 %v54, 4294901760
    %532 = vmatmul.mubr.f32.gmra.mrb[0].mxu0 %v531
    %v533 = vpop.f32.mrb[0].mxu0
    %v534 = vadd.f32 %v438, %v533
    %v535 = vpop.f32.mrb[0].mxu0
    %536 = vmatprep.mubr.f32.mxu0 0.0
    %v537 = vand.u32 %v56, 4294901760
    %538 = vmatmul.mubr.f32.gmra.mrb[0].mxu0 %v537
    %v539 = vpop.f32.mrb[0].mxu0
    %v540 = vadd.f32 %v446, %v539
    %v541 = vpop.f32.mrb[0].mxu0
    %542 = vmatprep.mubr.f32.mxu0 0.0
    %v543 = vand.u32 %v58, 4294901760
    %544 = vmatmul.mubr.f32.gmra.mrb[0].mxu0 %v543
    %v545 = vpop.f32.mrb[0].mxu0
    %v546 = vadd.f32 %v454, %v545
    %v547 = vpop.f32.mrb[0].mxu0
    %548 = vdwg.mxu0
    %549 = vmatprep.subr.mxu0 0.0
    %v550 = vand.u32 %v62, 4294901760
    %551 = vmatpush1.msra.mxu0 %v550
    %552 = vmatprep.subr.mxu0 0.0
    %553 = vmatpush1.msra.mxu0 0.0
    %554 = vmatprep.subr.mxu0 0.0
    %555 = vmatpush1.msra.mxu0 0.0
    %556 = vmatprep.subr.mxu0 0.0
    %557 = vmatpush1.msra.mxu0 0.0
    %558 = vmatprep.subr.mxu0 0.0
    %559 = vmatpush1.msra.mxu0 0.0
    %560 = vmatprep.subr.mxu0 0.0
    %561 = vmatpush1.msra.mxu0 0.0
    %562 = vmatprep.subr.mxu0 0.0
    %563 = vmatpush1.msra.mxu0 0.0
    %564 = vmatprep.subr.mxu0 0.0
    %565 = vmatpush1.msra.mxu0 0.0
    %566 = vmatprep.subr.mxu0 0.0
    %567 = vmatpush1.msra.mxu0 0.0
    %568 = vmatprep.subr.mxu0 0.0
    %569 = vmatpush1.msra.mxu0 0.0
    %570 = vmatprep.subr.mxu0 0.0
    %571 = vmatpush1.msra.mxu0 0.0
    %572 = vmatprep.subr.mxu0 0.0
    %573 = vmatpush1.msra.mxu0 0.0
    %574 = vmatprep.subr.mxu0 0.0
    %575 = vmatpush1.msra.mxu0 0.0
    %576 = vmatprep.subr.mxu0 0.0
    %577 = vmatpush1.msra.mxu0 0.0
    %578 = vmatprep.subr.mxu0 0.0
    %579 = vmatpush1.msra.mxu0 0.0
    %580 = vmatprep.subr.mxu0 0.0
    %581 = vmatpush1.msra.mxu0 0.0
    %582 = vmatprep.subr.mxu0 0.0
    %583 = vmatpush1.msra.mxu0 0.0
    %584 = vmatprep.subr.mxu0 0.0
    %585 = vmatpush1.msra.mxu0 0.0
    %586 = vmatprep.subr.mxu0 0.0
    %587 = vmatpush1.msra.mxu0 0.0
    %588 = vmatprep.subr.mxu0 0.0
    %589 = vmatpush1.msra.mxu0 0.0
    %590 = vmatprep.subr.mxu0 0.0
    %591 = vmatpush1.msra.mxu0 0.0
    %592 = vmatprep.subr.mxu0 0.0
    %593 = vmatpush1.msra.mxu0 0.0
    %594 = vmatprep.subr.mxu0 0.0
    %595 = vmatpush1.msra.mxu0 0.0
    %596 = vmatprep.subr.mxu0 0.0
    %597 = vmatpush1.msra.mxu0 0.0
    %598 = vmatprep.subr.mxu0 0.0
    %599 = vmatpush1.msra.mxu0 0.0
    %600 = vmatprep.subr.mxu0 0.0
    %601 = vmatpush1.msra.mxu0 0.0
    %602 = vmatprep.subr.mxu0 0.0
    %603 = vmatpush1.msra.mxu0 0.0
    %604 = vmatprep.subr.mxu0 0.0
    %605 = vmatpush1.msra.mxu0 0.0
    %606 = vmatprep.subr.mxu0 0.0
    %607 = vmatpush1.msra.mxu0 0.0
    %608 = vmatprep.subr.mxu0 0.0
    %609 = vmatpush1.msra.mxu0 0.0
    %610 = vmatprep.subr.mxu0 0.0
    %611 = vmatpush1.msra.mxu0 0.0
    %612 = vmatprep.subr.mxu0 0.0
    %613 = vmatpush1.msra.mxu0 0.0
    %614 = vmatprep.mubr.f32.mxu0 0.0
    %v615 = vand.u32 %v52, 4294901760
    %616 = vmatmul.mubr.f32.gmra.mrb[0].mxu0 %v615
    %v617 = vpop.f32.mrb[0].mxu0
    %v618 = vadd.f32 %v528, %v617
    %v619 = vpop.f32.mrb[0].mxu0
    %620 = vmatprep.mubr.f32.mxu0 0.0
    %v621 = vand.u32 %v54, 4294901760
    %622 = vmatmul.mubr.f32.gmra.mrb[0].mxu0 %v621
    %v623 = vpop.f32.mrb[0].mxu0
    %v624 = vadd.f32 %v534, %v623
    %v625 = vpop.f32.mrb[0].mxu0
    %626 = vmatprep.mubr.f32.mxu0 0.0
    %v627 = vand.u32 %v56, 4294901760
    %628 = vmatmul.mubr.f32.gmra.mrb[0].mxu0 %v627
    %v629 = vpop.f32.mrb[0].mxu0
    %v630 = vadd.f32 %v540, %v629
    %v631 = vpop.f32.mrb[0].mxu0
    %632 = vmatprep.mubr.f32.mxu0 0.0
    %v633 = vand.u32 %v58, 4294901760
    %634 = vmatmul.mubr.f32.gmra.mrb[0].mxu0 %v633
    %v635 = vpop.f32.mrb[0].mxu0
    %v636 = vadd.f32 %v546, %v635
    %v637 = vpop.f32.mrb[0].mxu0
    %638 = vdwg.mxu0
    %v640 = vsel %vm51, %v36, 0
    %v642 = vsel %vm51, %v31, 0
    %v645 = vsel %vm51, %v37, 0
    %v647 = vsel %vm51, %v33, 0
    %v650 = vsel %vm60, %v12, 0
    %652 = vmatprep.subr.mxu0 0.0
    %v653 = vand.u32 %v650, 4294901760
    %654 = vmatpush1.msra.mxu0 %v653
    %655 = vmatprep.subr.mxu0 0.0
    %656 = vmatpush1.msra.mxu0 0.0
    %657 = vmatprep.subr.mxu0 0.0
    %658 = vmatpush1.msra.mxu0 0.0
    %659 = vmatprep.subr.mxu0 0.0
    %660 = vmatpush1.msra.mxu0 0.0
    %661 = vmatprep.subr.mxu0 0.0
    %662 = vmatpush1.msra.mxu0 0.0
    %663 = vmatprep.subr.mxu0 0.0
    %664 = vmatpush1.msra.mxu0 0.0
    %665 = vmatprep.subr.mxu0 0.0
    %666 = vmatpush1.msra.mxu0 0.0
    %667 = vmatprep.subr.mxu0 0.0
    %668 = vmatpush1.msra.mxu0 0.0
    %669 = vmatprep.subr.mxu0 0.0
    %670 = vmatpush1.msra.mxu0 0.0
    %671 = vmatprep.subr.mxu0 0.0
    %672 = vmatpush1.msra.mxu0 0.0
    %673 = vmatprep.subr.mxu0 0.0
    %674 = vmatpush1.msra.mxu0 0.0
    %675 = vmatprep.subr.mxu0 0.0
    %676 = vmatpush1.msra.mxu0 0.0
    %677 = vmatprep.subr.mxu0 0.0
    %678 = vmatpush1.msra.mxu0 0.0
    %679 = vmatprep.subr.mxu0 0.0
    %680 = vmatpush1.msra.mxu0 0.0
    %681 = vmatprep.subr.mxu0 0.0
    %682 = vmatpush1.msra.mxu0 0.0
    %683 = vmatprep.subr.mxu0 0.0
    %684 = vmatpush1.msra.mxu0 0.0
    %685 = vmatprep.subr.mxu0 0.0
    %686 = vmatpush1.msra.mxu0 0.0
    %687 = vmatprep.subr.mxu0 0.0
    %688 = vmatpush1.msra.mxu0 0.0
    %689 = vmatprep.subr.mxu0 0.0
    %690 = vmatpush1.msra.mxu0 0.0
    %691 = vmatprep.subr.mxu0 0.0
    %692 = vmatpush1.msra.mxu0 0.0
    %693 = vmatprep.subr.mxu0 0.0
    %694 = vmatpush1.msra.mxu0 0.0
    %695 = vmatprep.subr.mxu0 0.0
    %696 = vmatpush1.msra.mxu0 0.0
    %697 = vmatprep.subr.mxu0 0.0
    %698 = vmatpush1.msra.mxu0 0.0
    %699 = vmatprep.subr.mxu0 0.0
    %700 = vmatpush1.msra.mxu0 0.0
    %701 = vmatprep.subr.mxu0 0.0
    %702 = vmatpush1.msra.mxu0 0.0
    %703 = vmatprep.subr.mxu0 0.0
    %704 = vmatpush1.msra.mxu0 0.0
    %705 = vmatprep.subr.mxu0 0.0
    %706 = vmatpush1.msra.mxu0 0.0
    %707 = vmatprep.subr.mxu0 0.0
    %708 = vmatpush1.msra.mxu0 0.0
    %709 = vmatprep.subr.mxu0 0.0
    %710 = vmatpush1.msra.mxu0 0.0
    %711 = vmatprep.subr.mxu0 0.0
    %712 = vmatpush1.msra.mxu0 0.0
    %713 = vmatprep.subr.mxu0 0.0
    %714 = vmatpush1.msra.mxu0 0.0
    %715 = vmatprep.subr.mxu0 0.0
    %716 = vmatpush1.msra.mxu0 0.0
    %717 = vmatprep.mubr.f32.mxu0 0.0
    %v718 = vand.u32 %v640, 4294901760
    %v719 = vsub.f32 %v640, %v718
    %v720 = vand.u32 %v719, 4294901760
    %v721 = vsub.f32 %v719, %v720
    %v722 = vand.u32 %v721, 4294901760
    %723 = vmatmul.mubr.f32.gmra.mrb[0].mxu0 %v722
    %v724 = vpop.f32.mrb[0].mxu0
    %v725 = vadd.f32 %v618, %v724
    %v726 = vpop.f32.mrb[0].mxu0
    %727 = vmatprep.mubr.f32.mxu0 0.0
    %v728 = vand.u32 %v642, 4294901760
    %v729 = vsub.f32 %v642, %v728
    %v730 = vand.u32 %v729, 4294901760
    %v731 = vsub.f32 %v729, %v730
    %v732 = vand.u32 %v731, 4294901760
    %733 = vmatmul.mubr.f32.gmra.mrb[0].mxu0 %v732
    %v734 = vpop.f32.mrb[0].mxu0
    %v735 = vadd.f32 %v624, %v734
    %v736 = vpop.f32.mrb[0].mxu0
    %737 = vmatprep.mubr.f32.mxu0 0.0
    %v738 = vand.u32 %v645, 4294901760
    %v739 = vsub.f32 %v645, %v738
    %v740 = vand.u32 %v739, 4294901760
    %v741 = vsub.f32 %v739, %v740
    %v742 = vand.u32 %v741, 4294901760
    %743 = vmatmul.mubr.f32.gmra.mrb[0].mxu0 %v742
    %v744 = vpop.f32.mrb[0].mxu0
    %v745 = vadd.f32 %v630, %v744
    %v746 = vpop.f32.mrb[0].mxu0
    %747 = vmatprep.mubr.f32.mxu0 0.0
    %v748 = vand.u32 %v647, 4294901760
    %v749 = vsub.f32 %v647, %v748
    %v750 = vand.u32 %v749, 4294901760
    %v751 = vsub.f32 %v749, %v750
    %v752 = vand.u32 %v751, 4294901760
    %753 = vmatmul.mubr.f32.gmra.mrb[0].mxu0 %v752
    %v754 = vpop.f32.mrb[0].mxu0
    %v755 = vadd.f32 %v636, %v754
    %v756 = vpop.f32.mrb[0].mxu0
    %757 = vdwg.mxu0
    %758 = vmatprep.subr.mxu0 0.0
    %v759 = vand.u32 %v650, 4294901760
    %v760 = vsub.f32 %v650, %v759
    %v761 = vand.u32 %v760, 4294901760
    %v762 = vsub.f32 %v760, %v761
    %v763 = vand.u32 %v762, 4294901760
    %764 = vmatpush1.msra.mxu0 %v763
    %765 = vmatprep.subr.mxu0 0.0
    %766 = vmatpush1.msra.mxu0 0.0
    %767 = vmatprep.subr.mxu0 0.0
    %768 = vmatpush1.msra.mxu0 0.0
    %769 = vmatprep.subr.mxu0 0.0
    %770 = vmatpush1.msra.mxu0 0.0
    %771 = vmatprep.subr.mxu0 0.0
    %772 = vmatpush1.msra.mxu0 0.0
    %773 = vmatprep.subr.mxu0 0.0
    %774 = vmatpush1.msra.mxu0 0.0
    %775 = vmatprep.subr.mxu0 0.0
    %776 = vmatpush1.msra.mxu0 0.0
    %777 = vmatprep.subr.mxu0 0.0
    %778 = vmatpush1.msra.mxu0 0.0
    %779 = vmatprep.subr.mxu0 0.0
    %780 = vmatpush1.msra.mxu0 0.0
    %781 = vmatprep.subr.mxu0 0.0
    %782 = vmatpush1.msra.mxu0 0.0
    %783 = vmatprep.subr.mxu0 0.0
    %784 = vmatpush1.msra.mxu0 0.0
    %785 = vmatprep.subr.mxu0 0.0
    %786 = vmatpush1.msra.mxu0 0.0
    %787 = vmatprep.subr.mxu0 0.0
    %788 = vmatpush1.msra.mxu0 0.0
    %789 = vmatprep.subr.mxu0 0.0
    %790 = vmatpush1.msra.mxu0 0.0
    %791 = vmatprep.subr.mxu0 0.0
    %792 = vmatpush1.msra.mxu0 0.0
    %793 = vmatprep.subr.mxu0 0.0
    %794 = vmatpush1.msra.mxu0 0.0
    %795 = vmatprep.subr.mxu0 0.0
    %796 = vmatpush1.msra.mxu0 0.0
    %797 = vmatprep.subr.mxu0 0.0
    %798 = vmatpush1.msra.mxu0 0.0
    %799 = vmatprep.subr.mxu0 0.0
    %800 = vmatpush1.msra.mxu0 0.0
    %801 = vmatprep.subr.mxu0 0.0
    %802 = vmatpush1.msra.mxu0 0.0
    %803 = vmatprep.subr.mxu0 0.0
    %804 = vmatpush1.msra.mxu0 0.0
    %805 = vmatprep.subr.mxu0 0.0
    %806 = vmatpush1.msra.mxu0 0.0
    %807 = vmatprep.subr.mxu0 0.0
    %808 = vmatpush1.msra.mxu0 0.0
    %809 = vmatprep.subr.mxu0 0.0
    %810 = vmatpush1.msra.mxu0 0.0
    %811 = vmatprep.subr.mxu0 0.0
    %812 = vmatpush1.msra.mxu0 0.0
    %813 = vmatprep.subr.mxu0 0.0
    %814 = vmatpush1.msra.mxu0 0.0
    %815 = vmatprep.subr.mxu0 0.0
    %816 = vmatpush1.msra.mxu0 0.0
    %817 = vmatprep.subr.mxu0 0.0
    %818 = vmatpush1.msra.mxu0 0.0
    %819 = vmatprep.subr.mxu0 0.0
    %820 = vmatpush1.msra.mxu0 0.0
    %821 = vmatprep.subr.mxu0 0.0
    %822 = vmatpush1.msra.mxu0 0.0
    %823 = vmatprep.subr.mxu0 0.0
    %824 = vmatpush1.msra.mxu0 0.0
    %825 = vmatprep.subr.mxu0 0.0
    %826 = vmatpush1.msra.mxu0 0.0
    %827 = vmatprep.mubr.f32.mxu0 0.0
    %v828 = vand.u32 %v640, 4294901760
    %829 = vmatmul.mubr.f32.gmra.mrb[0].mxu0 %v828
    %v830 = vpop.f32.mrb[0].mxu0
    %v831 = vadd.f32 %v725, %v830
    %v832 = vpop.f32.mrb[0].mxu0
    %833 = vmatprep.mubr.f32.mxu0 0.0
    %v834 = vand.u32 %v642, 4294901760
    %835 = vmatmul.mubr.f32.gmra.mrb[0].mxu0 %v834
    %v836 = vpop.f32.mrb[0].mxu0
    %v837 = vadd.f32 %v735, %v836
    %v838 = vpop.f32.mrb[0].mxu0
    %839 = vmatprep.mubr.f32.mxu0 0.0
    %v840 = vand.u32 %v645, 4294901760
    %841 = vmatmul.mubr.f32.gmra.mrb[0].mxu0 %v840
    %v842 = vpop.f32.mrb[0].mxu0
    %v843 = vadd.f32 %v745, %v842
    %v844 = vpop.f32.mrb[0].mxu0
    %845 = vmatprep.mubr.f32.mxu0 0.0
    %v846 = vand.u32 %v647, 4294901760
    %847 = vmatmul.mubr.f32.gmra.mrb[0].mxu0 %v846
    %v848 = vpop.f32.mrb[0].mxu0
    %v849 = vadd.f32 %v755, %v848
    %v850 = vpop.f32.mrb[0].mxu0
    %851 = vdwg.mxu0
    %852 = vmatprep.subr.mxu0 0.0
    %v853 = vand.u32 %v650, 4294901760
    %v854 = vsub.f32 %v650, %v853
    %855 = vmatpush1.msra.mxu0 %v854
    %856 = vmatprep.subr.mxu0 0.0
    %857 = vmatpush1.msra.mxu0 0.0
    %858 = vmatprep.subr.mxu0 0.0
    %859 = vmatpush1.msra.mxu0 0.0
    %860 = vmatprep.subr.mxu0 0.0
    %861 = vmatpush1.msra.mxu0 0.0
    %862 = vmatprep.subr.mxu0 0.0
    %863 = vmatpush1.msra.mxu0 0.0
    %864 = vmatprep.subr.mxu0 0.0
    %865 = vmatpush1.msra.mxu0 0.0
    %866 = vmatprep.subr.mxu0 0.0
    %867 = vmatpush1.msra.mxu0 0.0
    %868 = vmatprep.subr.mxu0 0.0
    %869 = vmatpush1.msra.mxu0 0.0
    %870 = vmatprep.subr.mxu0 0.0
    %871 = vmatpush1.msra.mxu0 0.0
    %872 = vmatprep.subr.mxu0 0.0
    %873 = vmatpush1.msra.mxu0 0.0
    %874 = vmatprep.subr.mxu0 0.0
    %875 = vmatpush1.msra.mxu0 0.0
    %876 = vmatprep.subr.mxu0 0.0
    %877 = vmatpush1.msra.mxu0 0.0
    %878 = vmatprep.subr.mxu0 0.0
    %879 = vmatpush1.msra.mxu0 0.0
    %880 = vmatprep.subr.mxu0 0.0
    %881 = vmatpush1.msra.mxu0 0.0
    %882 = vmatprep.subr.mxu0 0.0
    %883 = vmatpush1.msra.mxu0 0.0
    %884 = vmatprep.subr.mxu0 0.0
    %885 = vmatpush1.msra.mxu0 0.0
    %886 = vmatprep.subr.mxu0 0.0
    %887 = vmatpush1.msra.mxu0 0.0
    %888 = vmatprep.subr.mxu0 0.0
    %889 = vmatpush1.msra.mxu0 0.0
    %890 = vmatprep.subr.mxu0 0.0
    %891 = vmatpush1.msra.mxu0 0.0
    %892 = vmatprep.subr.mxu0 0.0
    %893 = vmatpush1.msra.mxu0 0.0
    %894 = vmatprep.subr.mxu0 0.0
    %895 = vmatpush1.msra.mxu0 0.0
    %896 = vmatprep.subr.mxu0 0.0
    %897 = vmatpush1.msra.mxu0 0.0
    %898 = vmatprep.subr.mxu0 0.0
    %899 = vmatpush1.msra.mxu0 0.0
    %900 = vmatprep.subr.mxu0 0.0
    %901 = vmatpush1.msra.mxu0 0.0
    %902 = vmatprep.subr.mxu0 0.0
    %903 = vmatpush1.msra.mxu0 0.0
    %904 = vmatprep.subr.mxu0 0.0
    %905 = vmatpush1.msra.mxu0 0.0
    %906 = vmatprep.subr.mxu0 0.0
    %907 = vmatpush1.msra.mxu0 0.0
    %908 = vmatprep.subr.mxu0 0.0
    %909 = vmatpush1.msra.mxu0 0.0
    %910 = vmatprep.subr.mxu0 0.0
    %911 = vmatpush1.msra.mxu0 0.0
    %912 = vmatprep.subr.mxu0 0.0
    %913 = vmatpush1.msra.mxu0 0.0
    %914 = vmatprep.subr.mxu0 0.0
    %915 = vmatpush1.msra.mxu0 0.0
    %916 = vmatprep.subr.mxu0 0.0
    %917 = vmatpush1.msra.mxu0 0.0
    %918 = vmatprep.mubr.f32.mxu0 0.0
    %v919 = vand.u32 %v640, 4294901760
    %v920 = vsub.f32 %v640, %v919
    %921 = vmatmul.mubr.f32.gmra.mrb[0].mxu0 %v920
    %v922 = vpop.f32.mrb[0].mxu0
    %v923 = vadd.f32 %v831, %v922
    %v924 = vpop.f32.mrb[0].mxu0
    %925 = vmatprep.mubr.f32.mxu0 0.0
    %v926 = vand.u32 %v642, 4294901760
    %v927 = vsub.f32 %v642, %v926
    %928 = vmatmul.mubr.f32.gmra.mrb[0].mxu0 %v927
    %v929 = vpop.f32.mrb[0].mxu0
    %v930 = vadd.f32 %v837, %v929
    %v931 = vpop.f32.mrb[0].mxu0
    %932 = vmatprep.mubr.f32.mxu0 0.0
    %v933 = vand.u32 %v645, 4294901760
    %v934 = vsub.f32 %v645, %v933
    %935 = vmatmul.mubr.f32.gmra.mrb[0].mxu0 %v934
    %v936 = vpop.f32.mrb[0].mxu0
    %v937 = vadd.f32 %v843, %v936
    %v938 = vpop.f32.mrb[0].mxu0
    %939 = vmatprep.mubr.f32.mxu0 0.0
    %v940 = vand.u32 %v647, 4294901760
    %v941 = vsub.f32 %v647, %v940
    %942 = vmatmul.mubr.f32.gmra.mrb[0].mxu0 %v941
    %v943 = vpop.f32.mrb[0].mxu0
    %v944 = vadd.f32 %v849, %v943
    %v945 = vpop.f32.mrb[0].mxu0
    %946 = vdwg.mxu0
    %947 = vmatprep.subr.mxu0 0.0
    %v948 = vand.u32 %v650, 4294901760
    %949 = vmatpush1.msra.mxu0 %v948
    %950 = vmatprep.subr.mxu0 0.0
    %951 = vmatpush1.msra.mxu0 0.0
    %952 = vmatprep.subr.mxu0 0.0
    %953 = vmatpush1.msra.mxu0 0.0
    %954 = vmatprep.subr.mxu0 0.0
    %955 = vmatpush1.msra.mxu0 0.0
    %956 = vmatprep.subr.mxu0 0.0
    %957 = vmatpush1.msra.mxu0 0.0
    %958 = vmatprep.subr.mxu0 0.0
    %959 = vmatpush1.msra.mxu0 0.0
    %960 = vmatprep.subr.mxu0 0.0
    %961 = vmatpush1.msra.mxu0 0.0
    %962 = vmatprep.subr.mxu0 0.0
    %963 = vmatpush1.msra.mxu0 0.0
    %964 = vmatprep.subr.mxu0 0.0
    %965 = vmatpush1.msra.mxu0 0.0
    %966 = vmatprep.subr.mxu0 0.0
    %967 = vmatpush1.msra.mxu0 0.0
    %968 = vmatprep.subr.mxu0 0.0
    %969 = vmatpush1.msra.mxu0 0.0
    %970 = vmatprep.subr.mxu0 0.0
    %971 = vmatpush1.msra.mxu0 0.0
    %972 = vmatprep.subr.mxu0 0.0
    %973 = vmatpush1.msra.mxu0 0.0
    %974 = vmatprep.subr.mxu0 0.0
    %975 = vmatpush1.msra.mxu0 0.0
    %976 = vmatprep.subr.mxu0 0.0
    %977 = vmatpush1.msra.mxu0 0.0
    %978 = vmatprep.subr.mxu0 0.0
    %979 = vmatpush1.msra.mxu0 0.0
    %980 = vmatprep.subr.mxu0 0.0
    %981 = vmatpush1.msra.mxu0 0.0
    %982 = vmatprep.subr.mxu0 0.0
    %983 = vmatpush1.msra.mxu0 0.0
    %984 = vmatprep.subr.mxu0 0.0
    %985 = vmatpush1.msra.mxu0 0.0
    %986 = vmatprep.subr.mxu0 0.0
    %987 = vmatpush1.msra.mxu0 0.0
    %988 = vmatprep.subr.mxu0 0.0
    %989 = vmatpush1.msra.mxu0 0.0
    %990 = vmatprep.subr.mxu0 0.0
    %991 = vmatpush1.msra.mxu0 0.0
    %992 = vmatprep.subr.mxu0 0.0
    %993 = vmatpush1.msra.mxu0 0.0
    %994 = vmatprep.subr.mxu0 0.0
    %995 = vmatpush1.msra.mxu0 0.0
    %996 = vmatprep.subr.mxu0 0.0
    %997 = vmatpush1.msra.mxu0 0.0
    %998 = vmatprep.subr.mxu0 0.0
    %999 = vmatpush1.msra.mxu0 0.0
    %1000 = vmatprep.subr.mxu0 0.0
    %1001 = vmatpush1.msra.mxu0 0.0
    %1002 = vmatprep.subr.mxu0 0.0
    %1003 = vmatpush1.msra.mxu0 0.0
    %1004 = vmatprep.subr.mxu0 0.0
    %1005 = vmatpush1.msra.mxu0 0.0
    %1006 = vmatprep.subr.mxu0 0.0
    %1007 = vmatpush1.msra.mxu0 0.0
    %1008 = vmatprep.subr.mxu0 0.0
    %1009 = vmatpush1.msra.mxu0 0.0
    %1010 = vmatprep.subr.mxu0 0.0
    %1011 = vmatpush1.msra.mxu0 0.0
    %1012 = vmatprep.mubr.f32.mxu0 0.0
    %v1013 = vand.u32 %v640, 4294901760
    %v1014 = vsub.f32 %v640, %v1013
    %v1015 = vand.u32 %v1014, 4294901760
    %1016 = vmatmul.mubr.f32.gmra.mrb[0].mxu0 %v1015
    %v1017 = vpop.f32.mrb[0].mxu0
    %v1018 = vadd.f32 %v923, %v1017
    %v1019 = vpop.f32.mrb[0].mxu0
    %1020 = vmatprep.mubr.f32.mxu0 0.0
    %v1021 = vand.u32 %v642, 4294901760
    %v1022 = vsub.f32 %v642, %v1021
    %v1023 = vand.u32 %v1022, 4294901760
    %1024 = vmatmul.mubr.f32.gmra.mrb[0].mxu0 %v1023
    %v1025 = vpop.f32.mrb[0].mxu0
    %v1026 = vadd.f32 %v930, %v1025
    %v1027 = vpop.f32.mrb[0].mxu0
    %1028 = vmatprep.mubr.f32.mxu0 0.0
    %v1029 = vand.u32 %v645, 4294901760
    %v1030 = vsub.f32 %v645, %v1029
    %v1031 = vand.u32 %v1030, 4294901760
    %1032 = vmatmul.mubr.f32.gmra.mrb[0].mxu0 %v1031
    %v1033 = vpop.f32.mrb[0].mxu0
    %v1034 = vadd.f32 %v937, %v1033
    %v1035 = vpop.f32.mrb[0].mxu0
    %1036 = vmatprep.mubr.f32.mxu0 0.0
    %v1037 = vand.u32 %v647, 4294901760
    %v1038 = vsub.f32 %v647, %v1037
    %v1039 = vand.u32 %v1038, 4294901760
    %1040 = vmatmul.mubr.f32.gmra.mrb[0].mxu0 %v1039
    %v1041 = vpop.f32.mrb[0].mxu0
    %v1042 = vadd.f32 %v944, %v1041
    %v1043 = vpop.f32.mrb[0].mxu0
    %1044 = vdwg.mxu0
    %1045 = vmatprep.subr.mxu0 0.0
    %v1046 = vand.u32 %v650, 4294901760
    %v1047 = vsub.f32 %v650, %v1046
    %v1048 = vand.u32 %v1047, 4294901760
    %1049 = vmatpush1.msra.mxu0 %v1048
    %1050 = vmatprep.subr.mxu0 0.0
    %1051 = vmatpush1.msra.mxu0 0.0
    %1052 = vmatprep.subr.mxu0 0.0
    %1053 = vmatpush1.msra.mxu0 0.0
    %1054 = vmatprep.subr.mxu0 0.0
    %1055 = vmatpush1.msra.mxu0 0.0
    %1056 = vmatprep.subr.mxu0 0.0
    %1057 = vmatpush1.msra.mxu0 0.0
    %1058 = vmatprep.subr.mxu0 0.0
    %1059 = vmatpush1.msra.mxu0 0.0
    %1060 = vmatprep.subr.mxu0 0.0
    %1061 = vmatpush1.msra.mxu0 0.0
    %1062 = vmatprep.subr.mxu0 0.0
    %1063 = vmatpush1.msra.mxu0 0.0
    %1064 = vmatprep.subr.mxu0 0.0
    %1065 = vmatpush1.msra.mxu0 0.0
    %1066 = vmatprep.subr.mxu0 0.0
    %1067 = vmatpush1.msra.mxu0 0.0
    %1068 = vmatprep.subr.mxu0 0.0
    %1069 = vmatpush1.msra.mxu0 0.0
    %1070 = vmatprep.subr.mxu0 0.0
    %1071 = vmatpush1.msra.mxu0 0.0
    %1072 = vmatprep.subr.mxu0 0.0
    %1073 = vmatpush1.msra.mxu0 0.0
    %1074 = vmatprep.subr.mxu0 0.0
    %1075 = vmatpush1.msra.mxu0 0.0
    %1076 = vmatprep.subr.mxu0 0.0
    %1077 = vmatpush1.msra.mxu0 0.0
    %1078 = vmatprep.subr.mxu0 0.0
    %1079 = vmatpush1.msra.mxu0 0.0
    %1080 = vmatprep.subr.mxu0 0.0
    %1081 = vmatpush1.msra.mxu0 0.0
    %1082 = vmatprep.subr.mxu0 0.0
    %1083 = vmatpush1.msra.mxu0 0.0
    %1084 = vmatprep.subr.mxu0 0.0
    %1085 = vmatpush1.msra.mxu0 0.0
    %1086 = vmatprep.subr.mxu0 0.0
    %1087 = vmatpush1.msra.mxu0 0.0
    %1088 = vmatprep.subr.mxu0 0.0
    %1089 = vmatpush1.msra.mxu0 0.0
    %1090 = vmatprep.subr.mxu0 0.0
    %1091 = vmatpush1.msra.mxu0 0.0
    %1092 = vmatprep.subr.mxu0 0.0
    %1093 = vmatpush1.msra.mxu0 0.0
    %1094 = vmatprep.subr.mxu0 0.0
    %1095 = vmatpush1.msra.mxu0 0.0
    %1096 = vmatprep.subr.mxu0 0.0
    %1097 = vmatpush1.msra.mxu0 0.0
    %1098 = vmatprep.subr.mxu0 0.0
    %1099 = vmatpush1.msra.mxu0 0.0
    %1100 = vmatprep.subr.mxu0 0.0
    %1101 = vmatpush1.msra.mxu0 0.0
    %1102 = vmatprep.subr.mxu0 0.0
    %1103 = vmatpush1.msra.mxu0 0.0
    %1104 = vmatprep.subr.mxu0 0.0
    %1105 = vmatpush1.msra.mxu0 0.0
    %1106 = vmatprep.subr.mxu0 0.0
    %1107 = vmatpush1.msra.mxu0 0.0
    %1108 = vmatprep.subr.mxu0 0.0
    %1109 = vmatpush1.msra.mxu0 0.0
    %1110 = vmatprep.subr.mxu0 0.0
    %1111 = vmatpush1.msra.mxu0 0.0
    %1112 = vmatprep.mubr.f32.mxu0 0.0
    %v1113 = vand.u32 %v640, 4294901760
    %1114 = vmatmul.mubr.f32.gmra.mrb[0].mxu0 %v1113
    %v1115 = vpop.f32.mrb[0].mxu0
    %v1116 = vadd.f32 %v1018, %v1115
    %v1117 = vpop.f32.mrb[0].mxu0
    %1118 = vmatprep.mubr.f32.mxu0 0.0
    %v1119 = vand.u32 %v642, 4294901760
    %1120 = vmatmul.mubr.f32.gmra.mrb[0].mxu0 %v1119
    %v1121 = vpop.f32.mrb[0].mxu0
    %v1122 = vadd.f32 %v1026, %v1121
    %v1123 = vpop.f32.mrb[0].mxu0
    %1124 = vmatprep.mubr.f32.mxu0 0.0
    %v1125 = vand.u32 %v645, 4294901760
    %1126 = vmatmul.mubr.f32.gmra.mrb[0].mxu0 %v1125
    %v1127 = vpop.f32.mrb[0].mxu0
    %v1128 = vadd.f32 %v1034, %v1127
    %v1129 = vpop.f32.mrb[0].mxu0
    %1130 = vmatprep.mubr.f32.mxu0 0.0
    %v1131 = vand.u32 %v647, 4294901760
    %1132 = vmatmul.mubr.f32.gmra.mrb[0].mxu0 %v1131
    %v1133 = vpop.f32.mrb[0].mxu0
    %v1134 = vadd.f32 %v1042, %v1133
    %v1135 = vpop.f32.mrb[0].mxu0
    %1136 = vdwg.mxu0
    %1137 = vmatprep.subr.mxu0 0.0
    %v1138 = vand.u32 %v650, 4294901760
    %1139 = vmatpush1.msra.mxu0 %v1138
    %1140 = vmatprep.subr.mxu0 0.0
    %1141 = vmatpush1.msra.mxu0 0.0
    %1142 = vmatprep.subr.mxu0 0.0
    %1143 = vmatpush1.msra.mxu0 0.0
    %1144 = vmatprep.subr.mxu0 0.0
    %1145 = vmatpush1.msra.mxu0 0.0
    %1146 = vmatprep.subr.mxu0 0.0
    %1147 = vmatpush1.msra.mxu0 0.0
    %1148 = vmatprep.subr.mxu0 0.0
    %1149 = vmatpush1.msra.mxu0 0.0
    %1150 = vmatprep.subr.mxu0 0.0
    %1151 = vmatpush1.msra.mxu0 0.0
    %1152 = vmatprep.subr.mxu0 0.0
    %1153 = vmatpush1.msra.mxu0 0.0
    %1154 = vmatprep.subr.mxu0 0.0
    %1155 = vmatpush1.msra.mxu0 0.0
    %1156 = vmatprep.subr.mxu0 0.0
    %1157 = vmatpush1.msra.mxu0 0.0
    %1158 = vmatprep.subr.mxu0 0.0
    %1159 = vmatpush1.msra.mxu0 0.0
    %1160 = vmatprep.subr.mxu0 0.0
    %1161 = vmatpush1.msra.mxu0 0.0
    %1162 = vmatprep.subr.mxu0 0.0
    %1163 = vmatpush1.msra.mxu0 0.0
    %1164 = vmatprep.subr.mxu0 0.0
    %1165 = vmatpush1.msra.mxu0 0.0
    %1166 = vmatprep.subr.mxu0 0.0
    %1167 = vmatpush1.msra.mxu0 0.0
    %1168 = vmatprep.subr.mxu0 0.0
    %1169 = vmatpush1.msra.mxu0 0.0
    %1170 = vmatprep.subr.mxu0 0.0
    %1171 = vmatpush1.msra.mxu0 0.0
    %1172 = vmatprep.subr.mxu0 0.0
    %1173 = vmatpush1.msra.mxu0 0.0
    %1174 = vmatprep.subr.mxu0 0.0
    %1175 = vmatpush1.msra.mxu0 0.0
    %1176 = vmatprep.subr.mxu0 0.0
    %1177 = vmatpush1.msra.mxu0 0.0
    %1178 = vmatprep.subr.mxu0 0.0
    %1179 = vmatpush1.msra.mxu0 0.0
    %1180 = vmatprep.subr.mxu0 0.0
    %1181 = vmatpush1.msra.mxu0 0.0
    %1182 = vmatprep.subr.mxu0 0.0
    %1183 = vmatpush1.msra.mxu0 0.0
    %1184 = vmatprep.subr.mxu0 0.0
    %1185 = vmatpush1.msra.mxu0 0.0
    %1186 = vmatprep.subr.mxu0 0.0
    %1187 = vmatpush1.msra.mxu0 0.0
    %1188 = vmatprep.subr.mxu0 0.0
    %1189 = vmatpush1.msra.mxu0 0.0
    %1190 = vmatprep.subr.mxu0 0.0
    %1191 = vmatpush1.msra.mxu0 0.0
    %1192 = vmatprep.subr.mxu0 0.0
    %1193 = vmatpush1.msra.mxu0 0.0
    %1194 = vmatprep.subr.mxu0 0.0
    %1195 = vmatpush1.msra.mxu0 0.0
    %1196 = vmatprep.subr.mxu0 0.0
    %1197 = vmatpush1.msra.mxu0 0.0
    %1198 = vmatprep.subr.mxu0 0.0
    %1199 = vmatpush1.msra.mxu0 0.0
    %1200 = vmatprep.subr.mxu0 0.0
    %1201 = vmatpush1.msra.mxu0 0.0
    %1202 = vmatprep.mubr.f32.mxu0 0.0
    %v1203 = vand.u32 %v640, 4294901760
    %1204 = vmatmul.mubr.f32.gmra.mrb[0].mxu0 %v1203
    %v1205 = vpop.f32.mrb[0].mxu0
    %v1206 = vadd.f32 %v1116, %v1205
    %v1207 = vpop.f32.mrb[0].mxu0
    %1208 = vmatprep.mubr.f32.mxu0 0.0
    %v1209 = vand.u32 %v642, 4294901760
    %1210 = vmatmul.mubr.f32.gmra.mrb[0].mxu0 %v1209
    %v1211 = vpop.f32.mrb[0].mxu0
    %v1212 = vadd.f32 %v1122, %v1211
    %v1213 = vpop.f32.mrb[0].mxu0
    %1214 = vmatprep.mubr.f32.mxu0 0.0
    %v1215 = vand.u32 %v645, 4294901760
    %1216 = vmatmul.mubr.f32.gmra.mrb[0].mxu0 %v1215
    %v1217 = vpop.f32.mrb[0].mxu0
    %v1218 = vadd.f32 %v1128, %v1217
    %v1219 = vpop.f32.mrb[0].mxu0
    %1220 = vmatprep.mubr.f32.mxu0 0.0
    %v1221 = vand.u32 %v647, 4294901760
    %1222 = vmatmul.mubr.f32.gmra.mrb[0].mxu0 %v1221
    %v1223 = vpop.f32.mrb[0].mxu0
    %v1224 = vadd.f32 %v1134, %v1223
    %v1225 = vpop.f32.mrb[0].mxu0
    %1226 = vdwg.mxu0
    %v1227 = vsel %vm51, %v41, 0
    %v1230 = vsel %vm51, %v49, 0
    %v1232 = vsel %vm51, %v44, 0
    %v1235 = vsel %vm51, %v50, 0
    %v1238 = vsel %vm60, %v16, 0
    %1240 = vmatprep.subr.mxu0 0.0
    %v1241 = vand.u32 %v1238, 4294901760
    %1242 = vmatpush1.msra.mxu0 %v1241
    %1243 = vmatprep.subr.mxu0 0.0
    %1244 = vmatpush1.msra.mxu0 0.0
    %1245 = vmatprep.subr.mxu0 0.0
    %1246 = vmatpush1.msra.mxu0 0.0
    %1247 = vmatprep.subr.mxu0 0.0
    %1248 = vmatpush1.msra.mxu0 0.0
    %1249 = vmatprep.subr.mxu0 0.0
    %1250 = vmatpush1.msra.mxu0 0.0
    %1251 = vmatprep.subr.mxu0 0.0
    %1252 = vmatpush1.msra.mxu0 0.0
    %1253 = vmatprep.subr.mxu0 0.0
    %1254 = vmatpush1.msra.mxu0 0.0
    %1255 = vmatprep.subr.mxu0 0.0
    %1256 = vmatpush1.msra.mxu0 0.0
    %1257 = vmatprep.subr.mxu0 0.0
    %1258 = vmatpush1.msra.mxu0 0.0
    %1259 = vmatprep.subr.mxu0 0.0
    %1260 = vmatpush1.msra.mxu0 0.0
    %1261 = vmatprep.subr.mxu0 0.0
    %1262 = vmatpush1.msra.mxu0 0.0
    %1263 = vmatprep.subr.mxu0 0.0
    %1264 = vmatpush1.msra.mxu0 0.0
    %1265 = vmatprep.subr.mxu0 0.0
    %1266 = vmatpush1.msra.mxu0 0.0
    %1267 = vmatprep.subr.mxu0 0.0
    %1268 = vmatpush1.msra.mxu0 0.0
    %1269 = vmatprep.subr.mxu0 0.0
    %1270 = vmatpush1.msra.mxu0 0.0
    %1271 = vmatprep.subr.mxu0 0.0
    %1272 = vmatpush1.msra.mxu0 0.0
    %1273 = vmatprep.subr.mxu0 0.0
    %1274 = vmatpush1.msra.mxu0 0.0
    %1275 = vmatprep.subr.mxu0 0.0
    %1276 = vmatpush1.msra.mxu0 0.0
    %1277 = vmatprep.subr.mxu0 0.0
    %1278 = vmatpush1.msra.mxu0 0.0
    %1279 = vmatprep.subr.mxu0 0.0
    %1280 = vmatpush1.msra.mxu0 0.0
    %1281 = vmatprep.subr.mxu0 0.0
    %1282 = vmatpush1.msra.mxu0 0.0
    %1283 = vmatprep.subr.mxu0 0.0
    %1284 = vmatpush1.msra.mxu0 0.0
    %1285 = vmatprep.subr.mxu0 0.0
    %1286 = vmatpush1.msra.mxu0 0.0
    %1287 = vmatprep.subr.mxu0 0.0
    %1288 = vmatpush1.msra.mxu0 0.0
    %1289 = vmatprep.subr.mxu0 0.0
    %1290 = vmatpush1.msra.mxu0 0.0
    %1291 = vmatprep.subr.mxu0 0.0
    %1292 = vmatpush1.msra.mxu0 0.0
    %1293 = vmatprep.subr.mxu0 0.0
    %1294 = vmatpush1.msra.mxu0 0.0
    %1295 = vmatprep.subr.mxu0 0.0
    %1296 = vmatpush1.msra.mxu0 0.0
    %1297 = vmatprep.subr.mxu0 0.0
    %1298 = vmatpush1.msra.mxu0 0.0
    %1299 = vmatprep.subr.mxu0 0.0
    %1300 = vmatpush1.msra.mxu0 0.0
    %1301 = vmatprep.subr.mxu0 0.0
    %1302 = vmatpush1.msra.mxu0 0.0
    %1303 = vmatprep.subr.mxu0 0.0
    %1304 = vmatpush1.msra.mxu0 0.0
    %1305 = vmatprep.mubr.f32.mxu0 0.0
    %v1306 = vand.u32 %v1227, 4294901760
    %v1307 = vsub.f32 %v1227, %v1306
    %v1308 = vand.u32 %v1307, 4294901760
    %v1309 = vsub.f32 %v1307, %v1308
    %v1310 = vand.u32 %v1309, 4294901760
    %1311 = vmatmul.mubr.f32.gmra.mrb[0].mxu0 %v1310
    %v1312 = vpop.f32.mrb[0].mxu0
    %v1313 = vadd.f32 0.0, %v1312
    %v1314 = vpop.f32.mrb[0].mxu0
    %1315 = vmatprep.mubr.f32.mxu0 0.0
    %v1316 = vand.u32 %v1230, 4294901760
    %v1317 = vsub.f32 %v1230, %v1316
    %v1318 = vand.u32 %v1317, 4294901760
    %v1319 = vsub.f32 %v1317, %v1318
    %v1320 = vand.u32 %v1319, 4294901760
    %1321 = vmatmul.mubr.f32.gmra.mrb[0].mxu0 %v1320
    %v1322 = vpop.f32.mrb[0].mxu0
    %v1323 = vadd.f32 0.0, %v1322
    %v1324 = vpop.f32.mrb[0].mxu0
    %1325 = vmatprep.mubr.f32.mxu0 0.0
    %v1326 = vand.u32 %v1232, 4294901760
    %v1327 = vsub.f32 %v1232, %v1326
    %v1328 = vand.u32 %v1327, 4294901760
    %v1329 = vsub.f32 %v1327, %v1328
    %v1330 = vand.u32 %v1329, 4294901760
    %1331 = vmatmul.mubr.f32.gmra.mrb[0].mxu0 %v1330
    %v1332 = vpop.f32.mrb[0].mxu0
    %v1333 = vadd.f32 0.0, %v1332
    %v1334 = vpop.f32.mrb[0].mxu0
    %1335 = vmatprep.mubr.f32.mxu0 0.0
    %v1336 = vand.u32 %v1235, 4294901760
    %v1337 = vsub.f32 %v1235, %v1336
    %v1338 = vand.u32 %v1337, 4294901760
    %v1339 = vsub.f32 %v1337, %v1338
    %v1340 = vand.u32 %v1339, 4294901760
    %1341 = vmatmul.mubr.f32.gmra.mrb[0].mxu0 %v1340
    %v1342 = vpop.f32.mrb[0].mxu0
    %v1343 = vadd.f32 0.0, %v1342
    %v1344 = vpop.f32.mrb[0].mxu0
    %1345 = vdwg.mxu0
    %1346 = vmatprep.subr.mxu0 0.0
    %v1347 = vand.u32 %v1238, 4294901760
    %v1348 = vsub.f32 %v1238, %v1347
    %v1349 = vand.u32 %v1348, 4294901760
    %v1350 = vsub.f32 %v1348, %v1349
    %v1351 = vand.u32 %v1350, 4294901760
    %1352 = vmatpush1.msra.mxu0 %v1351
    %1353 = vmatprep.subr.mxu0 0.0
    %1354 = vmatpush1.msra.mxu0 0.0
    %1355 = vmatprep.subr.mxu0 0.0
    %1356 = vmatpush1.msra.mxu0 0.0
    %1357 = vmatprep.subr.mxu0 0.0
    %1358 = vmatpush1.msra.mxu0 0.0
    %1359 = vmatprep.subr.mxu0 0.0
    %1360 = vmatpush1.msra.mxu0 0.0
    %1361 = vmatprep.subr.mxu0 0.0
    %1362 = vmatpush1.msra.mxu0 0.0
    %1363 = vmatprep.subr.mxu0 0.0
    %1364 = vmatpush1.msra.mxu0 0.0
    %1365 = vmatprep.subr.mxu0 0.0
    %1366 = vmatpush1.msra.mxu0 0.0
    %1367 = vmatprep.subr.mxu0 0.0
    %1368 = vmatpush1.msra.mxu0 0.0
    %1369 = vmatprep.subr.mxu0 0.0
    %1370 = vmatpush1.msra.mxu0 0.0
    %1371 = vmatprep.subr.mxu0 0.0
    %1372 = vmatpush1.msra.mxu0 0.0
    %1373 = vmatprep.subr.mxu0 0.0
    %1374 = vmatpush1.msra.mxu0 0.0
    %1375 = vmatprep.subr.mxu0 0.0
    %1376 = vmatpush1.msra.mxu0 0.0
    %1377 = vmatprep.subr.mxu0 0.0
    %1378 = vmatpush1.msra.mxu0 0.0
    %1379 = vmatprep.subr.mxu0 0.0
    %1380 = vmatpush1.msra.mxu0 0.0
    %1381 = vmatprep.subr.mxu0 0.0
    %1382 = vmatpush1.msra.mxu0 0.0
    %1383 = vmatprep.subr.mxu0 0.0
    %1384 = vmatpush1.msra.mxu0 0.0
    %1385 = vmatprep.subr.mxu0 0.0
    %1386 = vmatpush1.msra.mxu0 0.0
    %1387 = vmatprep.subr.mxu0 0.0
    %1388 = vmatpush1.msra.mxu0 0.0
    %1389 = vmatprep.subr.mxu0 0.0
    %1390 = vmatpush1.msra.mxu0 0.0
    %1391 = vmatprep.subr.mxu0 0.0
    %1392 = vmatpush1.msra.mxu0 0.0
    %1393 = vmatprep.subr.mxu0 0.0
    %1394 = vmatpush1.msra.mxu0 0.0
    %1395 = vmatprep.subr.mxu0 0.0
    %1396 = vmatpush1.msra.mxu0 0.0
    %1397 = vmatprep.subr.mxu0 0.0
    %1398 = vmatpush1.msra.mxu0 0.0
    %1399 = vmatprep.subr.mxu0 0.0
    %1400 = vmatpush1.msra.mxu0 0.0
    %1401 = vmatprep.subr.mxu0 0.0
    %1402 = vmatpush1.msra.mxu0 0.0
    %1403 = vmatprep.subr.mxu0 0.0
    %1404 = vmatpush1.msra.mxu0 0.0
    %1405 = vmatprep.subr.mxu0 0.0
    %1406 = vmatpush1.msra.mxu0 0.0
    %1407 = vmatprep.subr.mxu0 0.0
    %1408 = vmatpush1.msra.mxu0 0.0
    %1409 = vmatprep.subr.mxu0 0.0
    %1410 = vmatpush1.msra.mxu0 0.0
    %1411 = vmatprep.subr.mxu0 0.0
    %1412 = vmatpush1.msra.mxu0 0.0
    %1413 = vmatprep.subr.mxu0 0.0
    %1414 = vmatpush1.msra.mxu0 0.0
    %1415 = vmatprep.mubr.f32.mxu0 0.0
    %v1416 = vand.u32 %v1227, 4294901760
    %1417 = vmatmul.mubr.f32.gmra.mrb[0].mxu0 %v1416
    %v1418 = vpop.f32.mrb[0].mxu0
    %v1419 = vadd.f32 %v1313, %v1418
    %v1420 = vpop.f32.mrb[0].mxu0
    %1421 = vmatprep.mubr.f32.mxu0 0.0
    %v1422 = vand.u32 %v1230, 4294901760
    %1423 = vmatmul.mubr.f32.gmra.mrb[0].mxu0 %v1422
    %v1424 = vpop.f32.mrb[0].mxu0
    %v1425 = vadd.f32 %v1323, %v1424
    %v1426 = vpop.f32.mrb[0].mxu0
    %1427 = vmatprep.mubr.f32.mxu0 0.0
    %v1428 = vand.u32 %v1232, 4294901760
    %1429 = vmatmul.mubr.f32.gmra.mrb[0].mxu0 %v1428
    %v1430 = vpop.f32.mrb[0].mxu0
    %v1431 = vadd.f32 %v1333, %v1430
    %v1432 = vpop.f32.mrb[0].mxu0
    %1433 = vmatprep.mubr.f32.mxu0 0.0
    %v1434 = vand.u32 %v1235, 4294901760
    %1435 = vmatmul.mubr.f32.gmra.mrb[0].mxu0 %v1434
    %v1436 = vpop.f32.mrb[0].mxu0
    %v1437 = vadd.f32 %v1343, %v1436
    %v1438 = vpop.f32.mrb[0].mxu0
    %1439 = vdwg.mxu0
    %1440 = vmatprep.subr.mxu0 0.0
    %v1441 = vand.u32 %v1238, 4294901760
    %v1442 = vsub.f32 %v1238, %v1441
    %1443 = vmatpush1.msra.mxu0 %v1442
    %1444 = vmatprep.subr.mxu0 0.0
    %1445 = vmatpush1.msra.mxu0 0.0
    %1446 = vmatprep.subr.mxu0 0.0
    %1447 = vmatpush1.msra.mxu0 0.0
    %1448 = vmatprep.subr.mxu0 0.0
    %1449 = vmatpush1.msra.mxu0 0.0
    %1450 = vmatprep.subr.mxu0 0.0
    %1451 = vmatpush1.msra.mxu0 0.0
    %1452 = vmatprep.subr.mxu0 0.0
    %1453 = vmatpush1.msra.mxu0 0.0
    %1454 = vmatprep.subr.mxu0 0.0
    %1455 = vmatpush1.msra.mxu0 0.0
    %1456 = vmatprep.subr.mxu0 0.0
    %1457 = vmatpush1.msra.mxu0 0.0
    %1458 = vmatprep.subr.mxu0 0.0
    %1459 = vmatpush1.msra.mxu0 0.0
    %1460 = vmatprep.subr.mxu0 0.0
    %1461 = vmatpush1.msra.mxu0 0.0
    %1462 = vmatprep.subr.mxu0 0.0
    %1463 = vmatpush1.msra.mxu0 0.0
    %1464 = vmatprep.subr.mxu0 0.0
    %1465 = vmatpush1.msra.mxu0 0.0
    %1466 = vmatprep.subr.mxu0 0.0
    %1467 = vmatpush1.msra.mxu0 0.0
    %1468 = vmatprep.subr.mxu0 0.0
    %1469 = vmatpush1.msra.mxu0 0.0
    %1470 = vmatprep.subr.mxu0 0.0
    %1471 = vmatpush1.msra.mxu0 0.0
    %1472 = vmatprep.subr.mxu0 0.0
    %1473 = vmatpush1.msra.mxu0 0.0
    %1474 = vmatprep.subr.mxu0 0.0
    %1475 = vmatpush1.msra.mxu0 0.0
    %1476 = vmatprep.subr.mxu0 0.0
    %1477 = vmatpush1.msra.mxu0 0.0
    %1478 = vmatprep.subr.mxu0 0.0
    %1479 = vmatpush1.msra.mxu0 0.0
    %1480 = vmatprep.subr.mxu0 0.0
    %1481 = vmatpush1.msra.mxu0 0.0
    %1482 = vmatprep.subr.mxu0 0.0
    %1483 = vmatpush1.msra.mxu0 0.0
    %1484 = vmatprep.subr.mxu0 0.0
    %1485 = vmatpush1.msra.mxu0 0.0
    %1486 = vmatprep.subr.mxu0 0.0
    %1487 = vmatpush1.msra.mxu0 0.0
    %1488 = vmatprep.subr.mxu0 0.0
    %1489 = vmatpush1.msra.mxu0 0.0
    %1490 = vmatprep.subr.mxu0 0.0
    %1491 = vmatpush1.msra.mxu0 0.0
    %1492 = vmatprep.subr.mxu0 0.0
    %1493 = vmatpush1.msra.mxu0 0.0
    %1494 = vmatprep.subr.mxu0 0.0
    %1495 = vmatpush1.msra.mxu0 0.0
    %1496 = vmatprep.subr.mxu0 0.0
    %1497 = vmatpush1.msra.mxu0 0.0
    %1498 = vmatprep.subr.mxu0 0.0
    %1499 = vmatpush1.msra.mxu0 0.0
    %1500 = vmatprep.subr.mxu0 0.0
    %1501 = vmatpush1.msra.mxu0 0.0
    %1502 = vmatprep.subr.mxu0 0.0
    %1503 = vmatpush1.msra.mxu0 0.0
    %1504 = vmatprep.subr.mxu0 0.0
    %1505 = vmatpush1.msra.mxu0 0.0
    %1506 = vmatprep.mubr.f32.mxu0 0.0
    %v1507 = vand.u32 %v1227, 4294901760
    %v1508 = vsub.f32 %v1227, %v1507
    %1509 = vmatmul.mubr.f32.gmra.mrb[0].mxu0 %v1508
    %v1510 = vpop.f32.mrb[0].mxu0
    %v1511 = vadd.f32 %v1419, %v1510
    %v1512 = vpop.f32.mrb[0].mxu0
    %1513 = vmatprep.mubr.f32.mxu0 0.0
    %v1514 = vand.u32 %v1230, 4294901760
    %v1515 = vsub.f32 %v1230, %v1514
    %1516 = vmatmul.mubr.f32.gmra.mrb[0].mxu0 %v1515
    %v1517 = vpop.f32.mrb[0].mxu0
    %v1518 = vadd.f32 %v1425, %v1517
    %v1519 = vpop.f32.mrb[0].mxu0
    %1520 = vmatprep.mubr.f32.mxu0 0.0
    %v1521 = vand.u32 %v1232, 4294901760
    %v1522 = vsub.f32 %v1232, %v1521
    %1523 = vmatmul.mubr.f32.gmra.mrb[0].mxu0 %v1522
    %v1524 = vpop.f32.mrb[0].mxu0
    %v1525 = vadd.f32 %v1431, %v1524
    %v1526 = vpop.f32.mrb[0].mxu0
    %1527 = vmatprep.mubr.f32.mxu0 0.0
    %v1528 = vand.u32 %v1235, 4294901760
    %v1529 = vsub.f32 %v1235, %v1528
    %1530 = vmatmul.mubr.f32.gmra.mrb[0].mxu0 %v1529
    %v1531 = vpop.f32.mrb[0].mxu0
    %v1532 = vadd.f32 %v1437, %v1531
    %v1533 = vpop.f32.mrb[0].mxu0
    %1534 = vdwg.mxu0
    %1535 = vmatprep.subr.mxu0 0.0
    %v1536 = vand.u32 %v1238, 4294901760
    %1537 = vmatpush1.msra.mxu0 %v1536
    %1538 = vmatprep.subr.mxu0 0.0
    %1539 = vmatpush1.msra.mxu0 0.0
    %1540 = vmatprep.subr.mxu0 0.0
    %1541 = vmatpush1.msra.mxu0 0.0
    %1542 = vmatprep.subr.mxu0 0.0
    %1543 = vmatpush1.msra.mxu0 0.0
    %1544 = vmatprep.subr.mxu0 0.0
    %1545 = vmatpush1.msra.mxu0 0.0
    %1546 = vmatprep.subr.mxu0 0.0
    %1547 = vmatpush1.msra.mxu0 0.0
    %1548 = vmatprep.subr.mxu0 0.0
    %1549 = vmatpush1.msra.mxu0 0.0
    %1550 = vmatprep.subr.mxu0 0.0
    %1551 = vmatpush1.msra.mxu0 0.0
    %1552 = vmatprep.subr.mxu0 0.0
    %1553 = vmatpush1.msra.mxu0 0.0
    %1554 = vmatprep.subr.mxu0 0.0
    %1555 = vmatpush1.msra.mxu0 0.0
    %1556 = vmatprep.subr.mxu0 0.0
    %1557 = vmatpush1.msra.mxu0 0.0
    %1558 = vmatprep.subr.mxu0 0.0
    %1559 = vmatpush1.msra.mxu0 0.0
    %1560 = vmatprep.subr.mxu0 0.0
    %1561 = vmatpush1.msra.mxu0 0.0
    %1562 = vmatprep.subr.mxu0 0.0
    %1563 = vmatpush1.msra.mxu0 0.0
    %1564 = vmatprep.subr.mxu0 0.0
    %1565 = vmatpush1.msra.mxu0 0.0
    %1566 = vmatprep.subr.mxu0 0.0
    %1567 = vmatpush1.msra.mxu0 0.0
    %1568 = vmatprep.subr.mxu0 0.0
    %1569 = vmatpush1.msra.mxu0 0.0
    %1570 = vmatprep.subr.mxu0 0.0
    %1571 = vmatpush1.msra.mxu0 0.0
    %1572 = vmatprep.subr.mxu0 0.0
    %1573 = vmatpush1.msra.mxu0 0.0
    %1574 = vmatprep.subr.mxu0 0.0
    %1575 = vmatpush1.msra.mxu0 0.0
    %1576 = vmatprep.subr.mxu0 0.0
    %1577 = vmatpush1.msra.mxu0 0.0
    %1578 = vmatprep.subr.mxu0 0.0
    %1579 = vmatpush1.msra.mxu0 0.0
    %1580 = vmatprep.subr.mxu0 0.0
    %1581 = vmatpush1.msra.mxu0 0.0
    %1582 = vmatprep.subr.mxu0 0.0
    %1583 = vmatpush1.msra.mxu0 0.0
    %1584 = vmatprep.subr.mxu0 0.0
    %1585 = vmatpush1.msra.mxu0 0.0
    %1586 = vmatprep.subr.mxu0 0.0
    %1587 = vmatpush1.msra.mxu0 0.0
    %1588 = vmatprep.subr.mxu0 0.0
    %1589 = vmatpush1.msra.mxu0 0.0
    %1590 = vmatprep.subr.mxu0 0.0
    %1591 = vmatpush1.msra.mxu0 0.0
    %1592 = vmatprep.subr.mxu0 0.0
    %1593 = vmatpush1.msra.mxu0 0.0
    %1594 = vmatprep.subr.mxu0 0.0
    %1595 = vmatpush1.msra.mxu0 0.0
    %1596 = vmatprep.subr.mxu0 0.0
    %1597 = vmatpush1.msra.mxu0 0.0
    %1598 = vmatprep.subr.mxu0 0.0
    %1599 = vmatpush1.msra.mxu0 0.0
    %1600 = vmatprep.mubr.f32.mxu0 0.0
    %v1601 = vand.u32 %v1227, 4294901760
    %v1602 = vsub.f32 %v1227, %v1601
    %v1603 = vand.u32 %v1602, 4294901760
    %1604 = vmatmul.mubr.f32.gmra.mrb[0].mxu0 %v1603
    %v1605 = vpop.f32.mrb[0].mxu0
    %v1606 = vadd.f32 %v1511, %v1605
    %v1607 = vpop.f32.mrb[0].mxu0
    %1608 = vmatprep.mubr.f32.mxu0 0.0
    %v1609 = vand.u32 %v1230, 4294901760
    %v1610 = vsub.f32 %v1230, %v1609
    %v1611 = vand.u32 %v1610, 4294901760
    %1612 = vmatmul.mubr.f32.gmra.mrb[0].mxu0 %v1611
    %v1613 = vpop.f32.mrb[0].mxu0
    %v1614 = vadd.f32 %v1518, %v1613
    %v1615 = vpop.f32.mrb[0].mxu0
    %1616 = vmatprep.mubr.f32.mxu0 0.0
    %v1617 = vand.u32 %v1232, 4294901760
    %v1618 = vsub.f32 %v1232, %v1617
    %v1619 = vand.u32 %v1618, 4294901760
    %1620 = vmatmul.mubr.f32.gmra.mrb[0].mxu0 %v1619
    %v1621 = vpop.f32.mrb[0].mxu0
    %v1622 = vadd.f32 %v1525, %v1621
    %v1623 = vpop.f32.mrb[0].mxu0
    %1624 = vmatprep.mubr.f32.mxu0 0.0
    %v1625 = vand.u32 %v1235, 4294901760
    %v1626 = vsub.f32 %v1235, %v1625
    %v1627 = vand.u32 %v1626, 4294901760
    %1628 = vmatmul.mubr.f32.gmra.mrb[0].mxu0 %v1627
    %v1629 = vpop.f32.mrb[0].mxu0
    %v1630 = vadd.f32 %v1532, %v1629
    %v1631 = vpop.f32.mrb[0].mxu0
    %1632 = vdwg.mxu0
    %1633 = vmatprep.subr.mxu0 0.0
    %v1634 = vand.u32 %v1238, 4294901760
    %v1635 = vsub.f32 %v1238, %v1634
    %v1636 = vand.u32 %v1635, 4294901760
    %1637 = vmatpush1.msra.mxu0 %v1636
    %1638 = vmatprep.subr.mxu0 0.0
    %1639 = vmatpush1.msra.mxu0 0.0
    %1640 = vmatprep.subr.mxu0 0.0
    %1641 = vmatpush1.msra.mxu0 0.0
    %1642 = vmatprep.subr.mxu0 0.0
    %1643 = vmatpush1.msra.mxu0 0.0
    %1644 = vmatprep.subr.mxu0 0.0
    %1645 = vmatpush1.msra.mxu0 0.0
    %1646 = vmatprep.subr.mxu0 0.0
    %1647 = vmatpush1.msra.mxu0 0.0
    %1648 = vmatprep.subr.mxu0 0.0
    %1649 = vmatpush1.msra.mxu0 0.0
    %1650 = vmatprep.subr.mxu0 0.0
    %1651 = vmatpush1.msra.mxu0 0.0
    %1652 = vmatprep.subr.mxu0 0.0
    %1653 = vmatpush1.msra.mxu0 0.0
    %1654 = vmatprep.subr.mxu0 0.0
    %1655 = vmatpush1.msra.mxu0 0.0
    %1656 = vmatprep.subr.mxu0 0.0
    %1657 = vmatpush1.msra.mxu0 0.0
    %1658 = vmatprep.subr.mxu0 0.0
    %1659 = vmatpush1.msra.mxu0 0.0
    %1660 = vmatprep.subr.mxu0 0.0
    %1661 = vmatpush1.msra.mxu0 0.0
    %1662 = vmatprep.subr.mxu0 0.0
    %1663 = vmatpush1.msra.mxu0 0.0
    %1664 = vmatprep.subr.mxu0 0.0
    %1665 = vmatpush1.msra.mxu0 0.0
    %1666 = vmatprep.subr.mxu0 0.0
    %1667 = vmatpush1.msra.mxu0 0.0
    %1668 = vmatprep.subr.mxu0 0.0
    %1669 = vmatpush1.msra.mxu0 0.0
    %1670 = vmatprep.subr.mxu0 0.0
    %1671 = vmatpush1.msra.mxu0 0.0
    %1672 = vmatprep.subr.mxu0 0.0
    %1673 = vmatpush1.msra.mxu0 0.0
    %1674 = vmatprep.subr.mxu0 0.0
    %1675 = vmatpush1.msra.mxu0 0.0
    %1676 = vmatprep.subr.mxu0 0.0
    %1677 = vmatpush1.msra.mxu0 0.0
    %1678 = vmatprep.subr.mxu0 0.0
    %1679 = vmatpush1.msra.mxu0 0.0
    %1680 = vmatprep.subr.mxu0 0.0
    %1681 = vmatpush1.msra.mxu0 0.0
    %1682 = vmatprep.subr.mxu0 0.0
    %1683 = vmatpush1.msra.mxu0 0.0
    %1684 = vmatprep.subr.mxu0 0.0
    %1685 = vmatpush1.msra.mxu0 0.0
    %1686 = vmatprep.subr.mxu0 0.0
    %1687 = vmatpush1.msra.mxu0 0.0
    %1688 = vmatprep.subr.mxu0 0.0
    %1689 = vmatpush1.msra.mxu0 0.0
    %1690 = vmatprep.subr.mxu0 0.0
    %1691 = vmatpush1.msra.mxu0 0.0
    %1692 = vmatprep.subr.mxu0 0.0
    %1693 = vmatpush1.msra.mxu0 0.0
    %1694 = vmatprep.subr.mxu0 0.0
    %1695 = vmatpush1.msra.mxu0 0.0
    %1696 = vmatprep.subr.mxu0 0.0
    %1697 = vmatpush1.msra.mxu0 0.0
    %1698 = vmatprep.subr.mxu0 0.0
    %1699 = vmatpush1.msra.mxu0 0.0
    %1700 = vmatprep.mubr.f32.mxu0 0.0
    %v1701 = vand.u32 %v1227, 4294901760
    %1702 = vmatmul.mubr.f32.gmra.mrb[0].mxu0 %v1701
    %v1703 = vpop.f32.mrb[0].mxu0
    %v1704 = vadd.f32 %v1606, %v1703
    %v1705 = vpop.f32.mrb[0].mxu0
    %1706 = vmatprep.mubr.f32.mxu0 0.0
    %v1707 = vand.u32 %v1230, 4294901760
    %1708 = vmatmul.mubr.f32.gmra.mrb[0].mxu0 %v1707
    %v1709 = vpop.f32.mrb[0].mxu0
    %v1710 = vadd.f32 %v1614, %v1709
    %v1711 = vpop.f32.mrb[0].mxu0
    %1712 = vmatprep.mubr.f32.mxu0 0.0
    %v1713 = vand.u32 %v1232, 4294901760
    %1714 = vmatmul.mubr.f32.gmra.mrb[0].mxu0 %v1713
    %v1715 = vpop.f32.mrb[0].mxu0
    %v1716 = vadd.f32 %v1622, %v1715
    %v1717 = vpop.f32.mrb[0].mxu0
    %1718 = vmatprep.mubr.f32.mxu0 0.0
    %v1719 = vand.u32 %v1235, 4294901760
    %1720 = vmatmul.mubr.f32.gmra.mrb[0].mxu0 %v1719
    %v1721 = vpop.f32.mrb[0].mxu0
    %v1722 = vadd.f32 %v1630, %v1721
    %v1723 = vpop.f32.mrb[0].mxu0
    %1724 = vdwg.mxu0
    %1725 = vmatprep.subr.mxu0 0.0
    %v1726 = vand.u32 %v1238, 4294901760
    %1727 = vmatpush1.msra.mxu0 %v1726
    %1728 = vmatprep.subr.mxu0 0.0
    %1729 = vmatpush1.msra.mxu0 0.0
    %1730 = vmatprep.subr.mxu0 0.0
    %1731 = vmatpush1.msra.mxu0 0.0
    %1732 = vmatprep.subr.mxu0 0.0
    %1733 = vmatpush1.msra.mxu0 0.0
    %1734 = vmatprep.subr.mxu0 0.0
    %1735 = vmatpush1.msra.mxu0 0.0
    %1736 = vmatprep.subr.mxu0 0.0
    %1737 = vmatpush1.msra.mxu0 0.0
    %1738 = vmatprep.subr.mxu0 0.0
    %1739 = vmatpush1.msra.mxu0 0.0
    %1740 = vmatprep.subr.mxu0 0.0
    %1741 = vmatpush1.msra.mxu0 0.0
    %1742 = vmatprep.subr.mxu0 0.0
    %1743 = vmatpush1.msra.mxu0 0.0
    %1744 = vmatprep.subr.mxu0 0.0
    %1745 = vmatpush1.msra.mxu0 0.0
    %1746 = vmatprep.subr.mxu0 0.0
    %1747 = vmatpush1.msra.mxu0 0.0
    %1748 = vmatprep.subr.mxu0 0.0
    %1749 = vmatpush1.msra.mxu0 0.0
    %1750 = vmatprep.subr.mxu0 0.0
    %1751 = vmatpush1.msra.mxu0 0.0
    %1752 = vmatprep.subr.mxu0 0.0
    %1753 = vmatpush1.msra.mxu0 0.0
    %1754 = vmatprep.subr.mxu0 0.0
    %1755 = vmatpush1.msra.mxu0 0.0
    %1756 = vmatprep.subr.mxu0 0.0
    %1757 = vmatpush1.msra.mxu0 0.0
    %1758 = vmatprep.subr.mxu0 0.0
    %1759 = vmatpush1.msra.mxu0 0.0
    %1760 = vmatprep.subr.mxu0 0.0
    %1761 = vmatpush1.msra.mxu0 0.0
    %1762 = vmatprep.subr.mxu0 0.0
    %1763 = vmatpush1.msra.mxu0 0.0
    %1764 = vmatprep.subr.mxu0 0.0
    %1765 = vmatpush1.msra.mxu0 0.0
    %1766 = vmatprep.subr.mxu0 0.0
    %1767 = vmatpush1.msra.mxu0 0.0
    %1768 = vmatprep.subr.mxu0 0.0
    %1769 = vmatpush1.msra.mxu0 0.0
    %1770 = vmatprep.subr.mxu0 0.0
    %1771 = vmatpush1.msra.mxu0 0.0
    %1772 = vmatprep.subr.mxu0 0.0
    %1773 = vmatpush1.msra.mxu0 0.0
    %1774 = vmatprep.subr.mxu0 0.0
    %1775 = vmatpush1.msra.mxu0 0.0
    %1776 = vmatprep.subr.mxu0 0.0
    %1777 = vmatpush1.msra.mxu0 0.0
    %1778 = vmatprep.subr.mxu0 0.0
    %1779 = vmatpush1.msra.mxu0 0.0
    %1780 = vmatprep.subr.mxu0 0.0
    %1781 = vmatpush1.msra.mxu0 0.0
    %1782 = vmatprep.subr.mxu0 0.0
    %1783 = vmatpush1.msra.mxu0 0.0
    %1784 = vmatprep.subr.mxu0 0.0
    %1785 = vmatpush1.msra.mxu0 0.0
    %1786 = vmatprep.subr.mxu0 0.0
    %1787 = vmatpush1.msra.mxu0 0.0
    %1788 = vmatprep.subr.mxu0 0.0
    %1789 = vmatpush1.msra.mxu0 0.0
    %1790 = vmatprep.mubr.f32.mxu0 0.0
    %v1791 = vand.u32 %v1227, 4294901760
    %1792 = vmatmul.mubr.f32.gmra.mrb[0].mxu0 %v1791
    %v1793 = vpop.f32.mrb[0].mxu0
    %v1794 = vadd.f32 %v1704, %v1793
    %v1795 = vpop.f32.mrb[0].mxu0
    %1796 = vmatprep.mubr.f32.mxu0 0.0
    %v1797 = vand.u32 %v1230, 4294901760
    %1798 = vmatmul.mubr.f32.gmra.mrb[0].mxu0 %v1797
    %v1799 = vpop.f32.mrb[0].mxu0
    %v1800 = vadd.f32 %v1710, %v1799
    %v1801 = vpop.f32.mrb[0].mxu0
    %1802 = vmatprep.mubr.f32.mxu0 0.0
    %v1803 = vand.u32 %v1232, 4294901760
    %1804 = vmatmul.mubr.f32.gmra.mrb[0].mxu0 %v1803
    %v1805 = vpop.f32.mrb[0].mxu0
    %v1806 = vadd.f32 %v1716, %v1805
    %v1807 = vpop.f32.mrb[0].mxu0
    %1808 = vmatprep.mubr.f32.mxu0 0.0
    %v1809 = vand.u32 %v1235, 4294901760
    %1810 = vmatmul.mubr.f32.gmra.mrb[0].mxu0 %v1809
    %v1811 = vpop.f32.mrb[0].mxu0
    %v1812 = vadd.f32 %v1722, %v1811
    %v1813 = vpop.f32.mrb[0].mxu0
    %1814 = vdwg.mxu0
    %v1815 = vadd.f32 %v1206, %v1794
    %v1816 = vadd.f32 %v1212, %v1800
    %v1817 = vadd.f32 %v1218, %v1806
    %v1818 = vadd.f32 %v1224, %v1812
    %vm1819 = vcmask 261120
    %1820 = vst.msk [vmem:[#allocation2] sm:$0xff] %vm1819, %v1815
    %1821 = vst.msk [vmem:[#allocation2 + $0x8] sm:$0xff] %vm1819, %v1816
    %1822 = vst.msk [vmem:[#allocation2 + $0x10] sm:$0xff] %vm1819, %v1817
    %1823 = vst.msk [vmem:[#allocation2 + $0x18] sm:$0xff] %vm1819, %v1818
    // Predicated region
    $region10: #{tpu_custom_call.1} parent=1 // pred_check
      _
    $region11: #{tpu_custom_call.1} parent=1 // pred_check_branch
      %1825 = sbr.rel (0) target = $region13
    $region12: #{tpu_custom_call.1} parent=1 // pred_region
      %s1827 = ssub.s32 512, 512
      %1828 = vsyncadd [#allocation3], %s1827
      %s1829 = sshll.u32 [#allocation2], 4
      %s1830 = int_to_ptr.vmem [resolvable:$true] %s1829
      %1835 = dma.vmem_to_hbm [thread:$0]  %s1830, 512, %s2, [#allocation3], 128, 128, 8
    $region13: #{tpu_custom_call.1} parent=1 // pred_fallthru
      _
    // Predicated region
    $region14: #{tpu_custom_call.1} parent=1 // pred_check
      _
    $region15: #{tpu_custom_call.1} parent=1 // pred_check_branch
      %1837 = sbr.rel (0) target = $region17
    $region16: #{tpu_custom_call.1} parent=1 // pred_region
      %1838 = dma.done [#allocation3], 512
    $region17: #{tpu_custom_call.1} parent=1 // pred_fallthru
      _
    %1839 = vsyncpa [#allocation3], 1

</llo_original>
